<compile_context>
chip_gen: v6e
topology: v6e:2x2x1
jax: 0.10.0
libtpu: 0.0.40
codegen_flags: <defaults>
</compile_context>

<pallas_src>
import jax
import jax.numpy as jnp
import numpy as np
from jax import lax
from jax.experimental import pallas as pl
from jax.experimental.pallas import tpu as pltpu


def _fire_kernel(x_c_ref, x_a_ref, x_b_ref, wsq_ref, bsq_ref,
                 w1_ref, b1_ref, w3_ref, b3_ref, out_ref, pk_ref):
    # x_c_ref: (1, TR, W, Cin) bf16   rows of the current band
    # x_a_ref: (1, 1,  W, Cin) bf16   row just above the band (clamped)
    # x_b_ref: (1, 1,  W, Cin) bf16   row just below the band (clamped)
    # wsq_ref: (Cin, Csq)      bf16   squeeze 1x1 weights
    # w1_ref:  (Csq, C1)       bf16   expand1x1 weights
    # w3_ref:  (9*Csq, C3)     bf16   expand3x3 weights, rows = (ky, kx, ci)
    # b*_ref:  (1, C)          f32    biases
    # out_ref: (1, TR, W, Cout) bf16
    # pk_ref:  (TR, W, 9*Csq)  bf16   VMEM scratch for the packed 3x3 taps
    TR = x_c_ref.shape[1]
    W = x_c_ref.shape[2]
    Cin = x_c_ref.shape[3]
    Csq = wsq_ref.shape[1]
    C1 = w1_ref.shape[1]
    C3 = w3_ref.shape[1]
    HWt = TR * W

    t = pl.program_id(1)
    last_t = pl.num_programs(1) - 1

    # ---- squeeze 1x1 conv + ReLU over the band plus its 1-row halo ----
    x_all = jnp.concatenate(
        [x_a_ref[0, 0],                       # (W, Cin)
         x_c_ref[0].reshape(HWt, Cin),        # (TR*W, Cin)
         x_b_ref[0, 0]],                      # (W, Cin)
        axis=0)                               # ((TR+2)*W, Cin) bf16
    s = jnp.dot(x_all, wsq_ref[...], preferred_element_type=jnp.float32)
    s = jnp.maximum(s + bsq_ref[...], 0.0)    # ((TR+2)*W, Csq) f32

    # Zero halo rows that fall outside the image.  Must be applied to the
    # squeeze OUTPUT: a zero input row would give ReLU(b_sq) != 0.
    row = lax.broadcasted_iota(jnp.int32, ((TR + 2) * W, 1), 0)
    s = jnp.where(jnp.logical_and(row < W, t == 0), 0.0, s)
    s = jnp.where(jnp.logical_and(row >= (TR + 1) * W, t == last_t), 0.0, s)

    sb = s.astype(jnp.bfloat16)               # ((TR+2)*W, Csq) bf16

    # ---- expand 1x1 conv + ReLU on the TR*W center rows ----
    sb_c = sb[W:(TR + 1) * W]                 # (TR*W, Csq)
    e1 = jnp.dot(sb_c, w1_ref[...], preferred_element_type=jnp.float32)
    e1 = jnp.maximum(e1 + b1_ref[...], 0.0)   # (TR*W, C1) f32

    # ---- pack the nine shifted 3x3 taps (bf16) straight into VMEM scratch ----
    # pk[:, :, k*Csq:(k+1)*Csq] holds in[y+ky-1, x+kx-1, :] for k = ky*3+kx;
    # the +-1 column shift is done in the store addressing (no shifted copies),
    # zero column strips implement padding=1 horizontally.
    s3 = sb.reshape(TR + 2, W, Csq)
    zcol = jnp.zeros((TR, 1, Csq), jnp.bfloat16)
    for ky in range(3):
        rows = s3[ky:ky + TR]                 # (TR, W, Csq)
        for kx in range(3):
            lo = (ky * 3 + kx) * Csq
            hi = lo + Csq
            if kx == 0:       # tap reads column x-1; column 0 is outside
                pk_ref[:, 0:1, lo:hi] = zcol
                pk_ref[:, 1:W, lo:hi] = rows[:, 0:W - 1, :]
            elif kx == 1:
                pk_ref[:, :, lo:hi] = rows
            else:             # tap reads column x+1; column W-1 is outside
                pk_ref[:, 0:W - 1, lo:hi] = rows[:, 1:W, :]
                pk_ref[:, W - 1:W, lo:hi] = zcol

    # ---- expand 3x3 conv as one fat matmul over the packed taps ----
    packed = pk_ref[...].reshape(HWt, 9 * Csq)
    e3 = jnp.dot(packed, w3_ref[...], preferred_element_type=jnp.float32)
    e3 = jnp.maximum(e3 + b3_ref[...], 0.0)   # (TR*W, C3) f32

    # ---- single lane-dense store of the full Cout slab (bf16) ----
    out = jnp.concatenate([e1, e3], axis=-1).astype(out_ref.dtype)
    out_ref[0] = out.reshape(TR, W, C1 + C3)


def fire_module_pallas(x_nchw, params):
    """Forward pass of FireModule.  x_nchw: (N, Cin, H, W) float32."""
    w_sq, b_sq, w_e1, b_e1, w_e3, b_e3 = params
    N, Cin, H, W = x_nchw.shape
    Csq = w_sq.shape[0]
    C1 = w_e1.shape[0]
    C3 = w_e3.shape[0]
    Cout = C1 + C3

    # Row-tile size: prefer a small multiple of 8 that divides H (pipelining
    # depth + VMEM control); fall back to whole-image bands otherwise.
    TR = H
    for cand in (8, 16, 32):
        if H % cand == 0:
            TR = cand
            break
    n_tiles = H // TR

    # NCHW -> NHWC bf16 (channels on the lane axis).
    x_nhwc = jnp.transpose(x_nchw, (0, 2, 3, 1)).astype(jnp.bfloat16)

    # PyTorch OIHW conv weights -> matmul form (bf16; biases stay f32).
    wsq_k = jnp.transpose(w_sq[:, :, 0, 0], (1, 0)).astype(jnp.bfloat16)
    w1_k = jnp.transpose(w_e1[:, :, 0, 0], (1, 0)).astype(jnp.bfloat16)
    # (C3, Csq, 3, 3) -> (ky, kx, ci, C3) -> (9*Csq, C3); row = ky*3*Csq+kx*Csq+ci
    w3_k = jnp.transpose(w_e3, (2, 3, 1, 0)).reshape(9 * Csq, C3)
    w3_k = w3_k.astype(jnp.bfloat16)
    bsq_k = b_sq.reshape(1, Csq).astype(jnp.float32)
    b1_k = b_e1.reshape(1, C1).astype(jnp.float32)
    b3_k = b_e3.reshape(1, C3).astype(jnp.float32)

    grid_spec = pltpu.PrefetchScalarGridSpec(
        num_scalar_prefetch=0,
        grid=(N, n_tiles),
        in_specs=[
            # current band of rows
            pl.BlockSpec((1, TR, W, Cin), lambda n, t: (n, t, 0, 0)),
            # row just above the band (clamped to 0; zeroed in-kernel at t==0)
            pl.BlockSpec((1, 1, W, Cin),
                         lambda n, t: (n, jnp.maximum(t * TR - 1, 0), 0, 0)),
            # row just below the band (clamped; zeroed in-kernel at last tile)
            pl.BlockSpec((1, 1, W, Cin),
                         lambda n, t: (n, jnp.minimum((t + 1) * TR, H - 1), 0, 0)),
            pl.BlockSpec((Cin, Csq), lambda n, t: (0, 0)),
            pl.BlockSpec((1, Csq), lambda n, t: (0, 0)),
            pl.BlockSpec((Csq, C1), lambda n, t: (0, 0)),
            pl.BlockSpec((1, C1), lambda n, t: (0, 0)),
            pl.BlockSpec((9 * Csq, C3), lambda n, t: (0, 0)),
            pl.BlockSpec((1, C3), lambda n, t: (0, 0)),
        ],
        out_specs=pl.BlockSpec((1, TR, W, Cout), lambda n, t: (n, t, 0, 0)),
        scratch_shapes=[pltpu.VMEM((TR, W, 9 * Csq), jnp.bfloat16)],
    )

    # VMEM budget: double-buffered blocks + weights + packing scratch, with
    # headroom for f32 compute temps.
    bpe = 2  # bf16
    xc_b = TR * W * Cin * bpe
    halo_b = 2 * W * Cin * bpe
    out_b = TR * W * Cout * bpe
    w_b = (Cin * Csq + Csq * C1 + 9 * Csq * C3) * bpe + (Csq + C1 + C3) * 4
    scratch_b = TR * W * 9 * Csq * bpe
    footprint = 2 * (xc_b + halo_b + out_b + w_b) + scratch_b
    vmem_limit = int(min(64 * 2**20, max(32 * 2**20, 8 * footprint)))

    flops = 2 * N * H * W * (Cin * Csq + Csq * C1 + 9 * Csq * C3)
    bytes_accessed = (
        N * H * W * Cin * 2                               # bf16 input
        + (Cin * Csq + Csq * C1 + 9 * Csq * C3) * 2       # bf16 weights
        + (Csq + C1 + C3) * 4                             # f32 biases
        + N * H * W * Cout * 2                            # bf16 output
    )

    out_nhwc = pl.pallas_call(
        _fire_kernel,
        out_shape=jax.ShapeDtypeStruct((N, H, W, Cout), jnp.bfloat16),
        grid_spec=grid_spec,
        compiler_params=pltpu.CompilerParams(
            dimension_semantics=("parallel", "parallel"),
            vmem_limit_bytes=vmem_limit),
        cost_estimate=pl.CostEstimate(
            flops=flops, transcendentals=0, bytes_accessed=bytes_accessed),
    )(x_nhwc, x_nhwc, x_nhwc, wsq_k, bsq_k, w1_k, b1_k, w3_k, b3_k)

    # NHWC bf16 -> NCHW f32 to match the PyTorch output convention.
    return jnp.transpose(out_nhwc, (0, 3, 1, 2)).astype(jnp.float32)


def fire_module_reference(x_nchw, params):
    """Pure-JAX f32 reference (lax.conv) reproducing the PyTorch forward."""
    w_sq, b_sq, w_e1, b_e1, w_e3, b_e3 = params
    dn = ("NCHW", "OIHW", "NCHW")

    def conv(x, w, b, pad):
        y = lax.conv_general_dilated(x, w, (1, 1), pad, dimension_numbers=dn)
        return y + b.reshape(1, -1, 1, 1)

    s = jax.nn.relu(conv(x_nchw, w_sq, b_sq, [(0, 0), (0, 0)]))
    e1 = jax.nn.relu(conv(s, w_e1, b_e1, [(0, 0), (0, 0)]))
    e3 = jax.nn.relu(conv(s, w_e3, b_e3, [(1, 1), (1, 1)]))
    return jnp.concatenate([e1, e3], axis=1)


def init_params(key, in_channels, squeeze_channels, e1x1_channels, e3x3_channels):
    ks = jax.random.split(key, 6)
    w_sq = 0.1 * jax.random.normal(ks[0], (squeeze_channels, in_channels, 1, 1), jnp.float32)
    b_sq = 0.1 * jax.random.normal(ks[1], (squeeze_channels,), jnp.float32)
    w_e1 = 0.1 * jax.random.normal(ks[2], (e1x1_channels, squeeze_channels, 1, 1), jnp.float32)
    b_e1 = 0.1 * jax.random.normal(ks[3], (e1x1_channels,), jnp.float32)
    w_e3 = 0.1 * jax.random.normal(ks[4], (e3x3_channels, squeeze_channels, 3, 3), jnp.float32)
    b_e3 = 0.1 * jax.random.normal(ks[5], (e3x3_channels,), jnp.float32)
    return (w_sq, b_sq, w_e1, b_e1, w_e3, b_e3)


if __name__ == "__main__":
    key = jax.random.PRNGKey(0)
    k_x, k_p = jax.random.split(key)

    N, Cin, H, W = 2, 4, 16, 16
    Csq, C1, C3 = 6, 8, 8

    x = jax.random.normal(k_x, (N, Cin, H, W), jnp.float32)
    params = init_params(k_p, Cin, Csq, C1, C3)

    out = fire_module_pallas(x, params)
    out = jax.block_until_ready(out)

    ref = jax.block_until_ready(fire_module_reference(x, params))
    assert out.shape == (N, C1 + C3, H, W), out.shape
    # bf16 inputs/weights/output with f32 accumulation -> loosened tolerance
    # vs the pure-f32 reference.
    np.testing.assert_allclose(np.asarray(out), np.asarray(ref),
                               rtol=2e-2, atol=2e-2)
    print("KERNEL_OK")
</pallas_src>

<mosaic_0001>
module attributes {stable_mosaic.version = 11 : i64} {
  func.func @_fire_kernel(%arg0: i32, %arg1: i32, %arg2: memref<1x8x16x4xbf16, #tpu.memory_space<vmem>>, %arg3: memref<1x1x16x4xbf16, #tpu.memory_space<vmem>>, %arg4: memref<1x1x16x4xbf16, #tpu.memory_space<vmem>>, %arg5: memref<4x6xbf16, #tpu.memory_space<vmem>>, %arg6: memref<1x6xf32, #tpu.memory_space<vmem>>, %arg7: memref<6x8xbf16, #tpu.memory_space<vmem>>, %arg8: memref<1x8xf32, #tpu.memory_space<vmem>>, %arg9: memref<54x8xbf16, #tpu.memory_space<vmem>>, %arg10: memref<1x8xf32, #tpu.memory_space<vmem>>, %arg11: memref<1x8x16x16xbf16, #tpu.memory_space<vmem>>, %arg12: memref<8x16x54xbf16, #tpu.memory_space<vmem>>) attributes {dimension_semantics = [#tpu.dimension_semantics<parallel>, #tpu.dimension_semantics<parallel>], iteration_bounds = array<i64: 2, 2>, scalar_prefetch = 0 : i64, scratch_operands = 1 : i64, tpu.core_type = #tpu.core_type<tc>, window_params = [{transform_indices = @transform_0, window_bounds = array<i64: 1, 8, 16, 4>}, {transform_indices = @transform_1, window_bounds = array<i64: 1, 1, 16, 4>}, {transform_indices = @transform_2, window_bounds = array<i64: 1, 1, 16, 4>}, {pipeline_mode = #tpu.pipeline_mode<synchronous>, transform_indices = @transform_3, window_bounds = array<i64: 4, 6>}, {pipeline_mode = #tpu.pipeline_mode<synchronous>, transform_indices = @transform_4, window_bounds = array<i64: 1, 6>}, {pipeline_mode = #tpu.pipeline_mode<synchronous>, transform_indices = @transform_5, window_bounds = array<i64: 6, 8>}, {pipeline_mode = #tpu.pipeline_mode<synchronous>, transform_indices = @transform_6, window_bounds = array<i64: 1, 8>}, {pipeline_mode = #tpu.pipeline_mode<synchronous>, transform_indices = @transform_7, window_bounds = array<i64: 54, 8>}, {pipeline_mode = #tpu.pipeline_mode<synchronous>, transform_indices = @transform_8, window_bounds = array<i64: 1, 8>}, {transform_indices = @transform_9, window_bounds = array<i64: 1, 8, 16, 16>}]} {
    %c0 = arith.constant 0 : index
    %c0_0 = arith.constant 0 : index
    %c0_1 = arith.constant 0 : index
    %c0_2 = arith.constant 0 : index
    %0 = vector.load %arg3[%c0, %c0_0, %c0_1, %c0_2] : memref<1x1x16x4xbf16, #tpu.memory_space<vmem>>, vector<1x1x16x4xbf16>
    %1 = vector.shape_cast %0 : vector<1x1x16x4xbf16> to vector<16x4xbf16>
    %c0_3 = arith.constant 0 : index
    %c0_4 = arith.constant 0 : index
    %c0_5 = arith.constant 0 : index
    %c0_6 = arith.constant 0 : index
    %2 = vector.load %arg2[%c0_3, %c0_4, %c0_5, %c0_6] : memref<1x8x16x4xbf16, #tpu.memory_space<vmem>>, vector<1x8x16x4xbf16>
    %3 = vector.shape_cast %2 : vector<1x8x16x4xbf16> to vector<8x16x4xbf16>
    %4 = vector.shape_cast %3 : vector<8x16x4xbf16> to vector<128x4xbf16>
    %c0_7 = arith.constant 0 : index
    %c0_8 = arith.constant 0 : index
    %c0_9 = arith.constant 0 : index
    %c0_10 = arith.constant 0 : index
    %5 = vector.load %arg4[%c0_7, %c0_8, %c0_9, %c0_10] : memref<1x1x16x4xbf16, #tpu.memory_space<vmem>>, vector<1x1x16x4xbf16>
    %6 = vector.shape_cast %5 : vector<1x1x16x4xbf16> to vector<16x4xbf16>
    %7 = tpu.concatenate %1, %4, %6 in 0 : vector<16x4xbf16>, vector<128x4xbf16>, vector<16x4xbf16> -> vector<160x4xbf16>
    %c0_11 = arith.constant 0 : index
    %c0_12 = arith.constant 0 : index
    %8 = vector.load %arg5[%c0_11, %c0_12] : memref<4x6xbf16, #tpu.memory_space<vmem>>, vector<4x6xbf16>
    %cst = arith.constant dense<0.000000e+00> : vector<160x6xf32>
    %9 = tpu.matmul %7, %8, %cst {dimension_numbers = #tpu.dot_dimension_numbers<[1], [0], [0], [1], [0, 0, 1, 1], [], []>} : vector<160x4xbf16>, vector<4x6xbf16>, vector<160x6xf32> -> vector<160x6xf32>
    %c0_13 = arith.constant 0 : index
    %c0_14 = arith.constant 0 : index
    %10 = vector.load %arg6[%c0_13, %c0_14] : memref<1x6xf32, #tpu.memory_space<vmem>>, vector<1x6xf32>
    %11 = vector.broadcast %10 : vector<1x6xf32> to vector<160x6xf32>
    %12 = arith.addf %9, %11 : vector<160x6xf32>
    %cst_15 = arith.constant 0.000000e+00 : f32
    %13 = vector.broadcast %cst_15 : f32 to vector<160x6xf32>
    %14 = arith.maximumf %12, %13 : vector<160x6xf32>
    %15 = tpu.iota {dimensions = array<i32: 0>} : vector<160x1xi32>
    %c16_i32 = arith.constant 16 : i32
    %16 = vector.broadcast %c16_i32 : i32 to vector<160x1xi32>
    %17 = arith.cmpi slt, %15, %16 : vector<160x1xi32>
    %c0_i32 = arith.constant 0 : i32
    %18 = arith.cmpi eq, %arg1, %c0_i32 : i32
    %19 = vector.broadcast %18 : i1 to vector<160x1xi1>
    %20 = arith.andi %17, %19 : vector<160x1xi1>
    %cst_16 = arith.constant 0.000000e+00 : f32
    %21 = vector.shape_cast %20 : vector<160x1xi1> to vector<160x1xi1>
    %22 = vector.broadcast %21 : vector<160x1xi1> to vector<160x6xi1>
    %23 = vector.broadcast %cst_16 : f32 to vector<160x6xf32>
    %24 = arith.select %22, %23, %14 : vector<160x6xi1>, vector<160x6xf32>
    %c144_i32 = arith.constant 144 : i32
    %25 = vector.broadcast %c144_i32 : i32 to vector<160x1xi32>
    %26 = arith.cmpi sge, %15, %25 : vector<160x1xi32>
    %c1_i32 = arith.constant 1 : i32
    %27 = arith.cmpi eq, %arg1, %c1_i32 : i32
    %28 = vector.broadcast %27 : i1 to vector<160x1xi1>
    %29 = arith.andi %26, %28 : vector<160x1xi1>
    %cst_17 = arith.constant 0.000000e+00 : f32
    %30 = vector.shape_cast %29 : vector<160x1xi1> to vector<160x1xi1>
    %31 = vector.broadcast %30 : vector<160x1xi1> to vector<160x6xi1>
    %32 = vector.broadcast %cst_17 : f32 to vector<160x6xf32>
    %33 = arith.select %31, %32, %24 : vector<160x6xi1>, vector<160x6xf32>
    %34 = arith.truncf %33 : vector<160x6xf32> to vector<160x6xbf16>
    %35 = vector.extract_strided_slice %34 {offsets = [16, 0], sizes = [128, 6], strides = [1, 1]} : vector<160x6xbf16> to vector<128x6xbf16>
    %c0_18 = arith.constant 0 : index
    %c0_19 = arith.constant 0 : index
    %36 = vector.load %arg7[%c0_18, %c0_19] : memref<6x8xbf16, #tpu.memory_space<vmem>>, vector<6x8xbf16>
    %cst_20 = arith.constant dense<0.000000e+00> : vector<128x8xf32>
    %37 = tpu.matmul %35, %36, %cst_20 {dimension_numbers = #tpu.dot_dimension_numbers<[1], [0], [0], [1], [0, 0, 1, 1], [], []>} : vector<128x6xbf16>, vector<6x8xbf16>, vector<128x8xf32> -> vector<128x8xf32>
    %c0_21 = arith.constant 0 : index
    %c0_22 = arith.constant 0 : index
    %38 = vector.load %arg8[%c0_21, %c0_22] : memref<1x8xf32, #tpu.memory_space<vmem>>, vector<1x8xf32>
    %39 = vector.broadcast %38 : vector<1x8xf32> to vector<128x8xf32>
    %40 = arith.addf %37, %39 : vector<128x8xf32>
    %cst_23 = arith.constant 0.000000e+00 : f32
    %41 = vector.broadcast %cst_23 : f32 to vector<128x8xf32>
    %42 = arith.maximumf %40, %41 : vector<128x8xf32>
    %43 = vector.shape_cast %34 : vector<160x6xbf16> to vector<10x16x6xbf16>
    %cst_24 = arith.constant 0.000000e+00 : bf16
    %44 = vector.broadcast %cst_24 : bf16 to vector<8x1x6xbf16>
    %45 = vector.extract_strided_slice %43 {offsets = [0, 0, 0], sizes = [8, 16, 6], strides = [1, 1, 1]} : vector<10x16x6xbf16> to vector<8x16x6xbf16>
    %c0_25 = arith.constant 0 : index
    %c0_26 = arith.constant 0 : index
    %c0_27 = arith.constant 0 : index
    %46 = vector.load %arg12[%c0_25, %c0_26, %c0_27] : memref<8x16x54xbf16, #tpu.memory_space<vmem>>, vector<8x1x6xbf16>
    tpu.vector_store %arg12[%c0_25, %c0_26, %c0_27], %44 {strides = array<i32>} : memref<8x16x54xbf16, #tpu.memory_space<vmem>>, vector<8x1x6xbf16>,
    %47 = vector.extract_strided_slice %45 {offsets = [0, 0, 0], sizes = [8, 15, 6], strides = [1, 1, 1]} : vector<8x16x6xbf16> to vector<8x15x6xbf16>
    %c0_28 = arith.constant 0 : index
    %c1 = arith.constant 1 : index
    %c0_29 = arith.constant 0 : index
    %48 = vector.load %arg12[%c0_28, %c1, %c0_29] : memref<8x16x54xbf16, #tpu.memory_space<vmem>>, vector<8x15x6xbf16>
    tpu.vector_store %arg12[%c0_28, %c1, %c0_29], %47 {strides = array<i32>} : memref<8x16x54xbf16, #tpu.memory_space<vmem>>, vector<8x15x6xbf16>,
    %c0_30 = arith.constant 0 : index
    %c0_31 = arith.constant 0 : index
    %c6 = arith.constant 6 : index
    %49 = vector.load %arg12[%c0_30, %c0_31, %c6] : memref<8x16x54xbf16, #tpu.memory_space<vmem>>, vector<8x16x6xbf16>
    tpu.vector_store %arg12[%c0_30, %c0_31, %c6], %45 {strides = array<i32>} : memref<8x16x54xbf16, #tpu.memory_space<vmem>>, vector<8x16x6xbf16>,
    %50 = vector.extract_strided_slice %45 {offsets = [0, 1, 0], sizes = [8, 15, 6], strides = [1, 1, 1]} : vector<8x16x6xbf16> to vector<8x15x6xbf16>
    %c0_32 = arith.constant 0 : index
    %c0_33 = arith.constant 0 : index
    %c12 = arith.constant 12 : index
    %51 = vector.load %arg12[%c0_32, %c0_33, %c12] : memref<8x16x54xbf16, #tpu.memory_space<vmem>>, vector<8x15x6xbf16>
    tpu.vector_store %arg12[%c0_32, %c0_33, %c12], %50 {strides = array<i32>} : memref<8x16x54xbf16, #tpu.memory_space<vmem>>, vector<8x15x6xbf16>,
    %c0_34 = arith.constant 0 : index
    %c15 = arith.constant 15 : index
    %c12_35 = arith.constant 12 : index
    %52 = vector.load %arg12[%c0_34, %c15, %c12_35] : memref<8x16x54xbf16, #tpu.memory_space<vmem>>, vector<8x1x6xbf16>
    tpu.vector_store %arg12[%c0_34, %c15, %c12_35], %44 {strides = array<i32>} : memref<8x16x54xbf16, #tpu.memory_space<vmem>>, vector<8x1x6xbf16>,
    %53 = vector.extract_strided_slice %43 {offsets = [1, 0, 0], sizes = [8, 16, 6], strides = [1, 1, 1]} : vector<10x16x6xbf16> to vector<8x16x6xbf16>
    %c0_36 = arith.constant 0 : index
    %c0_37 = arith.constant 0 : index
    %c18 = arith.constant 18 : index
    %54 = vector.load %arg12[%c0_36, %c0_37, %c18] : memref<8x16x54xbf16, #tpu.memory_space<vmem>>, vector<8x1x6xbf16>
    tpu.vector_store %arg12[%c0_36, %c0_37, %c18], %44 {strides = array<i32>} : memref<8x16x54xbf16, #tpu.memory_space<vmem>>, vector<8x1x6xbf16>,
    %55 = vector.extract_strided_slice %53 {offsets = [0, 0, 0], sizes = [8, 15, 6], strides = [1, 1, 1]} : vector<8x16x6xbf16> to vector<8x15x6xbf16>
    %c0_38 = arith.constant 0 : index
    %c1_39 = arith.constant 1 : index
    %c18_40 = arith.constant 18 : index
    %56 = vector.load %arg12[%c0_38, %c1_39, %c18_40] : memref<8x16x54xbf16, #tpu.memory_space<vmem>>, vector<8x15x6xbf16>
    tpu.vector_store %arg12[%c0_38, %c1_39, %c18_40], %55 {strides = array<i32>} : memref<8x16x54xbf16, #tpu.memory_space<vmem>>, vector<8x15x6xbf16>,
    %c0_41 = arith.constant 0 : index
    %c0_42 = arith.constant 0 : index
    %c24 = arith.constant 24 : index
    %57 = vector.load %arg12[%c0_41, %c0_42, %c24] : memref<8x16x54xbf16, #tpu.memory_space<vmem>>, vector<8x16x6xbf16>
    tpu.vector_store %arg12[%c0_41, %c0_42, %c24], %53 {strides = array<i32>} : memref<8x16x54xbf16, #tpu.memory_space<vmem>>, vector<8x16x6xbf16>,
    %58 = vector.extract_strided_slice %53 {offsets = [0, 1, 0], sizes = [8, 15, 6], strides = [1, 1, 1]} : vector<8x16x6xbf16> to vector<8x15x6xbf16>
    %c0_43 = arith.constant 0 : index
    %c0_44 = arith.constant 0 : index
    %c30 = arith.constant 30 : index
    %59 = vector.load %arg12[%c0_43, %c0_44, %c30] : memref<8x16x54xbf16, #tpu.memory_space<vmem>>, vector<8x15x6xbf16>
    tpu.vector_store %arg12[%c0_43, %c0_44, %c30], %58 {strides = array<i32>} : memref<8x16x54xbf16, #tpu.memory_space<vmem>>, vector<8x15x6xbf16>,
    %c0_45 = arith.constant 0 : index
    %c15_46 = arith.constant 15 : index
    %c30_47 = arith.constant 30 : index
    %60 = vector.load %arg12[%c0_45, %c15_46, %c30_47] : memref<8x16x54xbf16, #tpu.memory_space<vmem>>, vector<8x1x6xbf16>
    tpu.vector_store %arg12[%c0_45, %c15_46, %c30_47], %44 {strides = array<i32>} : memref<8x16x54xbf16, #tpu.memory_space<vmem>>, vector<8x1x6xbf16>,
    %61 = vector.extract_strided_slice %43 {offsets = [2, 0, 0], sizes = [8, 16, 6], strides = [1, 1, 1]} : vector<10x16x6xbf16> to vector<8x16x6xbf16>
    %c0_48 = arith.constant 0 : index
    %c0_49 = arith.constant 0 : index
    %c36 = arith.constant 36 : index
    %62 = vector.load %arg12[%c0_48, %c0_49, %c36] : memref<8x16x54xbf16, #tpu.memory_space<vmem>>, vector<8x1x6xbf16>
    tpu.vector_store %arg12[%c0_48, %c0_49, %c36], %44 {strides = array<i32>} : memref<8x16x54xbf16, #tpu.memory_space<vmem>>, vector<8x1x6xbf16>,
    %63 = vector.extract_strided_slice %61 {offsets = [0, 0, 0], sizes = [8, 15, 6], strides = [1, 1, 1]} : vector<8x16x6xbf16> to vector<8x15x6xbf16>
    %c0_50 = arith.constant 0 : index
    %c1_51 = arith.constant 1 : index
    %c36_52 = arith.constant 36 : index
    %64 = vector.load %arg12[%c0_50, %c1_51, %c36_52] : memref<8x16x54xbf16, #tpu.memory_space<vmem>>, vector<8x15x6xbf16>
    tpu.vector_store %arg12[%c0_50, %c1_51, %c36_52], %63 {strides = array<i32>} : memref<8x16x54xbf16, #tpu.memory_space<vmem>>, vector<8x15x6xbf16>,
    %c0_53 = arith.constant 0 : index
    %c0_54 = arith.constant 0 : index
    %c42 = arith.constant 42 : index
    %65 = vector.load %arg12[%c0_53, %c0_54, %c42] : memref<8x16x54xbf16, #tpu.memory_space<vmem>>, vector<8x16x6xbf16>
    tpu.vector_store %arg12[%c0_53, %c0_54, %c42], %61 {strides = array<i32>} : memref<8x16x54xbf16, #tpu.memory_space<vmem>>, vector<8x16x6xbf16>,
    %66 = vector.extract_strided_slice %61 {offsets = [0, 1, 0], sizes = [8, 15, 6], strides = [1, 1, 1]} : vector<8x16x6xbf16> to vector<8x15x6xbf16>
    %c0_55 = arith.constant 0 : index
    %c0_56 = arith.constant 0 : index
    %c48 = arith.constant 48 : index
    %67 = vector.load %arg12[%c0_55, %c0_56, %c48] : memref<8x16x54xbf16, #tpu.memory_space<vmem>>, vector<8x15x6xbf16>
    tpu.vector_store %arg12[%c0_55, %c0_56, %c48], %66 {strides = array<i32>} : memref<8x16x54xbf16, #tpu.memory_space<vmem>>, vector<8x15x6xbf16>,
    %c0_57 = arith.constant 0 : index
    %c15_58 = arith.constant 15 : index
    %c48_59 = arith.constant 48 : index
    %68 = vector.load %arg12[%c0_57, %c15_58, %c48_59] : memref<8x16x54xbf16, #tpu.memory_space<vmem>>, vector<8x1x6xbf16>
    tpu.vector_store %arg12[%c0_57, %c15_58, %c48_59], %44 {strides = array<i32>} : memref<8x16x54xbf16, #tpu.memory_space<vmem>>, vector<8x1x6xbf16>,
    %c0_60 = arith.constant 0 : index
    %c0_61 = arith.constant 0 : index
    %c0_62 = arith.constant 0 : index
    %69 = vector.load %arg12[%c0_60, %c0_61, %c0_62] : memref<8x16x54xbf16, #tpu.memory_space<vmem>>, vector<8x16x54xbf16>
    %70 = vector.shape_cast %69 : vector<8x16x54xbf16> to vector<128x54xbf16>
    %c0_63 = arith.constant 0 : index
    %c0_64 = arith.constant 0 : index
    %71 = vector.load %arg9[%c0_63, %c0_64] : memref<54x8xbf16, #tpu.memory_space<vmem>>, vector<54x8xbf16>
    %cst_65 = arith.constant dense<0.000000e+00> : vector<128x8xf32>
    %72 = tpu.matmul %70, %71, %cst_65 {dimension_numbers = #tpu.dot_dimension_numbers<[1], [0], [0], [1], [0, 0, 1, 1], [], []>} : vector<128x54xbf16>, vector<54x8xbf16>, vector<128x8xf32> -> vector<128x8xf32>
    %c0_66 = arith.constant 0 : index
    %c0_67 = arith.constant 0 : index
    %73 = vector.load %arg10[%c0_66, %c0_67] : memref<1x8xf32, #tpu.memory_space<vmem>>, vector<1x8xf32>
    %74 = vector.broadcast %73 : vector<1x8xf32> to vector<128x8xf32>
    %75 = arith.addf %72, %74 : vector<128x8xf32>
    %cst_68 = arith.constant 0.000000e+00 : f32
    %76 = vector.broadcast %cst_68 : f32 to vector<128x8xf32>
    %77 = arith.maximumf %75, %76 : vector<128x8xf32>
    %78 = tpu.concatenate %42, %77 in 1 : vector<128x8xf32>, vector<128x8xf32> -> vector<128x16xf32>
    %79 = arith.truncf %78 : vector<128x16xf32> to vector<128x16xbf16>
    %80 = vector.shape_cast %79 : vector<128x16xbf16> to vector<8x16x16xbf16>
    %c0_69 = arith.constant 0 : index
    %c0_70 = arith.constant 0 : index
    %c0_71 = arith.constant 0 : index
    %c0_72 = arith.constant 0 : index
    %81 = vector.load %arg11[%c0_69, %c0_70, %c0_71, %c0_72] : memref<1x8x16x16xbf16, #tpu.memory_space<vmem>>, vector<1x8x16x16xbf16>
    %82 = vector.shape_cast %81 : vector<1x8x16x16xbf16> to vector<8x16x16xbf16>
    %83 = vector.shape_cast %80 : vector<8x16x16xbf16> to vector<1x8x16x16xbf16>
    tpu.vector_store %arg11[%c0_69, %c0_70, %c0_71, %c0_72], %83 {strides = array<i32>} : memref<1x8x16x16xbf16, #tpu.memory_space<vmem>>, vector<1x8x16x16xbf16>,
    return
  }
  func.func @transform_0(%arg0: i32, %arg1: i32) -> (i32, i32, i32, i32) {
    %c0_i32 = arith.constant 0 : i32
    %c0_i32_0 = arith.constant 0 : i32
    %c0_i32_1 = arith.constant 0 : i32
    return %arg0, %arg1, %c0_i32, %c0_i32_0 : i32, i32, i32, i32
  }
  func.func @transform_1(%arg0: i32, %arg1: i32) -> (i32, i32, i32, i32) {
    %c8_i32 = arith.constant 8 : i32
    %0 = arith.muli %arg1, %c8_i32 : i32
    %c1_i32 = arith.constant 1 : i32
    %1 = arith.subi %0, %c1_i32 : i32
    %c0_i32 = arith.constant 0 : i32
    %2 = arith.maxsi %1, %c0_i32 : i32
    %c0_i32_0 = arith.constant 0 : i32
    %c0_i32_1 = arith.constant 0 : i32
    %c0_i32_2 = arith.constant 0 : i32
    return %arg0, %2, %c0_i32_0, %c0_i32_1 : i32, i32, i32, i32
  }
  func.func @transform_2(%arg0: i32, %arg1: i32) -> (i32, i32, i32, i32) {
    %c1_i32 = arith.constant 1 : i32
    %0 = arith.addi %arg1, %c1_i32 : i32
    %c8_i32 = arith.constant 8 : i32
    %1 = arith.muli %0, %c8_i32 : i32
    %c15_i32 = arith.constant 15 : i32
    %2 = arith.minsi %1, %c15_i32 : i32
    %c0_i32 = arith.constant 0 : i32
    %c0_i32_0 = arith.constant 0 : i32
    %c0_i32_1 = arith.constant 0 : i32
    return %arg0, %2, %c0_i32, %c0_i32_0 : i32, i32, i32, i32
  }
  func.func @transform_3(%arg0: i32, %arg1: i32) -> (i32, i32) {
    %c0_i32 = arith.constant 0 : i32
    %c0_i32_0 = arith.constant 0 : i32
    %c0_i32_1 = arith.constant 0 : i32
    return %c0_i32, %c0_i32_0 : i32, i32
  }
  func.func @transform_4(%arg0: i32, %arg1: i32) -> (i32, i32) {
    %c0_i32 = arith.constant 0 : i32
    %c0_i32_0 = arith.constant 0 : i32
    %c0_i32_1 = arith.constant 0 : i32
    return %c0_i32, %c0_i32_0 : i32, i32
  }
  func.func @transform_5(%arg0: i32, %arg1: i32) -> (i32, i32) {
    %c0_i32 = arith.constant 0 : i32
    %c0_i32_0 = arith.constant 0 : i32
    %c0_i32_1 = arith.constant 0 : i32
    return %c0_i32, %c0_i32_0 : i32, i32
  }
  func.func @transform_6(%arg0: i32, %arg1: i32) -> (i32, i32) {
    %c0_i32 = arith.constant 0 : i32
    %c0_i32_0 = arith.constant 0 : i32
    %c0_i32_1 = arith.constant 0 : i32
    return %c0_i32, %c0_i32_0 : i32, i32
  }
  func.func @transform_7(%arg0: i32, %arg1: i32) -> (i32, i32) {
    %c0_i32 = arith.constant 0 : i32
    %c0_i32_0 = arith.constant 0 : i32
    %c0_i32_1 = arith.constant 0 : i32
    return %c0_i32, %c0_i32_0 : i32, i32
  }
  func.func @transform_8(%arg0: i32, %arg1: i32) -> (i32, i32) {
    %c0_i32 = arith.constant 0 : i32
    %c0_i32_0 = arith.constant 0 : i32
    %c0_i32_1 = arith.constant 0 : i32
    return %c0_i32, %c0_i32_0 : i32, i32
  }
  func.func @transform_9(%arg0: i32, %arg1: i32) -> (i32, i32, i32, i32) {
    %c0_i32 = arith.constant 0 : i32
    %c0_i32_0 = arith.constant 0 : i32
    %c0_i32_1 = arith.constant 0 : i32
    return %arg0, %arg1, %c0_i32, %c0_i32_0 : i32, i32, i32, i32
  }
}

</mosaic_0001>

<llo_original>
// kernel: tpu_custom_call.1
$region0: #{tpu_custom_call.1}
  #allocation0 [shape = 'u32[]', space=smem, size = 0x4, offset = 0x4, fixed_abs, tag = 'smem constant byte address 0x4 - core index']
  #allocation1 [shape = 'u32[144,128]{1,0:T(1,128)}', space=vmem, size = 0x12000, scoped, tag = 'internal scratch']
  #allocation2 [shape = 'bf16[8,16,54]{2,1,0:T(8,128)(2,1)}', space=vmem, size = 0x8000, scoped, tag = 'scratch operand']
  %s0 = inlined_call_operand.vmem [shape: bf16[2,16,16,4], index: 0, kind: input, shape index: {}]
  %s1 = inlined_call_operand.vmem [shape: bf16[2,16,16,4], index: 1, kind: input, shape index: {}]
  %s2 = inlined_call_operand.vmem [shape: bf16[2,16,16,4], index: 2, kind: input, shape index: {}]
  %s3 = inlined_call_operand.vmem [shape: bf16[4,6], index: 3, kind: input, shape index: {}]
  %s4 = inlined_call_operand.vmem [shape: f32[1,6], index: 4, kind: input, shape index: {}]
  %s5 = inlined_call_operand.vmem [shape: bf16[6,8], index: 5, kind: input, shape index: {}]
  %s6 = inlined_call_operand.vmem [shape: f32[1,8], index: 6, kind: input, shape index: {}]
  %s7 = inlined_call_operand.vmem [shape: bf16[54,8], index: 7, kind: input, shape index: {}]
  %s8 = inlined_call_operand.vmem [shape: f32[1,8], index: 8, kind: input, shape index: {}]
  %s9 = inlined_call_operand.hbm [shape: bf16[2,16,16,16], index: 9, kind: output, shape index: {}]
  %s10 = sld [smem:[#allocation0]]
  $region69: #{tpu_custom_call.1} parent=0
    _
  %s12 = ssub.s32 1, %s10
  %s13 = scalar_select 0, %s12, %s10
  $region1: #{tpu_custom_call.1} parent=0
    #allocation3 [shape = 'u8[65536]{0}', space=vmem, size = 0x10000, scoped, tag = 'output window, operand 0']
    #allocation4 [shape = 's32[2]{0}', space=sflag, size = 0x8, scoped, tag = 'scoped memory for tpu_custom_call.1']
    %14 = vsyncpa [#allocation4], 0
    %s15 = scalar_lea.sflag [#allocation4], 1
    %16 = vsyncpa %s15, 0
    loop: start=0, step=1, limit=6
    $region2: #{tpu_custom_call.1} parent=1 // loop_pre_header
      _
    $region3: #{tpu_custom_call.1} parent=1 // loop_header
      %s18 = sphi 0, %s22
      %p19 = scmp.ge.s32.totalorder %s18, 6
      %s25 = sphi 0, %s37
      %s26 = sphi 0, %s33
      %s27 = sphi 0, %s25
      %s28 = sphi 0, %s26
      %s29 = sphi 0, %s27
      %s30 = sphi 0, %s28
      %s42 = sphi 0, %s44
      %s45 = sphi 0, %s42
      %s46 = sphi 0, %s45
      %s62 = sphi 0, %s46
      %s78 = sphi 0, %s80
      %s81 = sphi 0, %s78
      %s82 = sphi 0, %s81
      %s98 = sphi 0, %s82
      %s114 = sphi 0, %s116
      %s117 = sphi 0, %s114
      %s118 = sphi 0, %s117
      %s134 = sphi 0, %s118
      %s138 = sphi 0, %s138
      %s140 = sphi 0, %s138
      %s141 = sphi 0, %s140
      %s155 = sphi 0, %s141
      %s159 = sphi 0, %s159
      %s161 = sphi 0, %s159
      %s162 = sphi 0, %s161
      %s176 = sphi 0, %s162
      %s180 = sphi 0, %s180
      %s182 = sphi 0, %s180
      %s183 = sphi 0, %s182
      %s197 = sphi 0, %s183
      %s201 = sphi 0, %s201
      %s203 = sphi 0, %s201
      %s204 = sphi 0, %s203
      %s218 = sphi 0, %s204
      %s222 = sphi 0, %s222
      %s224 = sphi 0, %s222
      %s225 = sphi 0, %s224
      %s239 = sphi 0, %s225
      %s243 = sphi 0, %s243
      %s245 = sphi 0, %s243
      %s246 = sphi 0, %s245
      %s260 = sphi 0, %s246
      %s268 = sphi 0, %s270
      %s271 = sphi 0, %s268
      %s272 = sphi 0, %s271
      %s288 = sphi 0, %s272
    $region4: #{tpu_custom_call.1} parent=1 // loop_header_branch
      %21 = sbr.rel (%p19) target = $region8
    $region5: #{tpu_custom_call.1} parent=1 // loop_body
      %s23 = ssub.s32 %s18, 1
      %s24 = ssub.s32 %s18, 2
      %s31 = sadd.s32 1, %s26
      %p32 = scmp.ge.s32.totalorder %s31, 2
      %s33 = scalar_select %p32, 0, %s31
      %s34 = sadd.s32 1, %s25
      %s35 = scalar_select %p32, %s34, %s25
      %p36 = scmp.ge.s32.totalorder %s35, 2
      %s37 = scalar_select %p36, 0, %s35
      %s38 = ssub.s32 %s25, %s37
      %s39 = ssub.s32 %s26, %s33
      %s40 = sor.u32 %s38, %s39
      %p41 = scmp.eq.s32.totalorder %s40, 0
      %s43 = sadd.s32 %s42, 1
      %s44 = scalar_select %p41, %s42, %s43
      %p47 = pneg %p41
      %p48 = scmp.eq.s32.totalorder %s18, 3
      %p49 = por %p47, %p48
      %p50 = scmp.ne.s32.totalorder %s42, %s45
      %p51 = scmp.eq.s32.totalorder %s18, 0
      %p52 = por %p50, %p51
      %p53 = scmp.ne.s32.totalorder %s42, %s45
      %p54 = scmp.eq.s32.totalorder %s23, 3
      %p55 = por %p53, %p54
      %p56 = scmp.ne.s32.totalorder %s45, %s46
      %p57 = scmp.eq.s32.totalorder %s23, 0
      %p58 = por %p56, %p57
      %p59 = scmp.ne.s32.totalorder %s45, %s46
      %p60 = scmp.eq.s32.totalorder %s24, 3
      %p61 = por %p59, %p60
      %p63 = scmp.ne.s32.totalorder %s46, %s62
      %p64 = scmp.eq.s32.totalorder %s24, 0
      %p65 = por %p63, %p64
      %s66 = smul.u32 %s26, 8
      %s67 = ssub.s32 %s66, 1
      %p68 = scmp.gt.s32.totalorder %s67, 0
      %s69 = scalar_select %p68, %s67, 0
      %s70 = smul.u32 %s33, 8
      %s71 = ssub.s32 %s70, 1
      %p72 = scmp.gt.s32.totalorder %s71, 0
      %s73 = scalar_select %p72, %s71, 0
      %s74 = ssub.s32 %s25, %s37
      %s75 = ssub.s32 %s69, %s73
      %s76 = sor.u32 %s74, %s75
      %p77 = scmp.eq.s32.totalorder %s76, 0
      %s79 = sadd.s32 %s78, 1
      %s80 = scalar_select %p77, %s78, %s79
      %p83 = pneg %p77
      %p84 = scmp.eq.s32.totalorder %s18, 3
      %p85 = por %p83, %p84
      %p86 = scmp.ne.s32.totalorder %s78, %s81
      %p87 = scmp.eq.s32.totalorder %s18, 0
      %p88 = por %p86, %p87
      %p89 = scmp.ne.s32.totalorder %s78, %s81
      %p90 = scmp.eq.s32.totalorder %s23, 3
      %p91 = por %p89, %p90
      %p92 = scmp.ne.s32.totalorder %s81, %s82
      %p93 = scmp.eq.s32.totalorder %s23, 0
      %p94 = por %p92, %p93
      %p95 = scmp.ne.s32.totalorder %s81, %s82
      %p96 = scmp.eq.s32.totalorder %s24, 3
      %p97 = por %p95, %p96
      %p99 = scmp.ne.s32.totalorder %s82, %s98
      %p100 = scmp.eq.s32.totalorder %s24, 0
      %p101 = por %p99, %p100
      %s102 = sadd.s32 %s26, 1
      %s103 = smul.u32 %s102, 8
      %p104 = scmp.lt.s32.totalorder %s103, 15
      %s105 = scalar_select %p104, %s103, 15
      %s106 = sadd.s32 %s33, 1
      %s107 = smul.u32 %s106, 8
      %p108 = scmp.lt.s32.totalorder %s107, 15
      %s109 = scalar_select %p108, %s107, 15
      %s110 = ssub.s32 %s25, %s37
      %s111 = ssub.s32 %s105, %s109
      %s112 = sor.u32 %s110, %s111
      %p113 = scmp.eq.s32.totalorder %s112, 0
      %s115 = sadd.s32 %s114, 1
      %s116 = scalar_select %p113, %s114, %s115
      %p119 = pneg %p113
      %p120 = scmp.eq.s32.totalorder %s18, 3
      %p121 = por %p119, %p120
      %p122 = scmp.ne.s32.totalorder %s114, %s117
      %p123 = scmp.eq.s32.totalorder %s18, 0
      %p124 = por %p122, %p123
      %p125 = scmp.ne.s32.totalorder %s114, %s117
      %p126 = scmp.eq.s32.totalorder %s23, 3
      %p127 = por %p125, %p126
      %p128 = scmp.ne.s32.totalorder %s117, %s118
      %p129 = scmp.eq.s32.totalorder %s23, 0
      %p130 = por %p128, %p129
      %p131 = scmp.ne.s32.totalorder %s117, %s118
      %p132 = scmp.eq.s32.totalorder %s24, 3
      %p133 = por %p131, %p132
      %p135 = scmp.ne.s32.totalorder %s118, %s134
      %p136 = scmp.eq.s32.totalorder %s24, 0
      %p137 = por %p135, %p136
      %s139 = sadd.s32 %s138, 1
      %p142 = scmp.eq.s32.totalorder %s18, 3
      %p143 = scmp.ne.s32.totalorder %s138, %s140
      %p144 = scmp.eq.s32.totalorder %s18, 0
      %p145 = por %p143, %p144
      %p146 = scmp.ne.s32.totalorder %s138, %s140
      %p147 = scmp.eq.s32.totalorder %s23, 3
      %p148 = por %p146, %p147
      %p149 = scmp.ne.s32.totalorder %s140, %s141
      %p150 = scmp.eq.s32.totalorder %s23, 0
      %p151 = por %p149, %p150
      %p152 = scmp.ne.s32.totalorder %s140, %s141
      %p153 = scmp.eq.s32.totalorder %s24, 3
      %p154 = por %p152, %p153
      %p156 = scmp.ne.s32.totalorder %s141, %s155
      %p157 = scmp.eq.s32.totalorder %s24, 0
      %p158 = por %p156, %p157
      %s160 = sadd.s32 %s159, 1
      %p163 = scmp.eq.s32.totalorder %s18, 3
      %p164 = scmp.ne.s32.totalorder %s159, %s161
      %p165 = scmp.eq.s32.totalorder %s18, 0
      %p166 = por %p164, %p165
      %p167 = scmp.ne.s32.totalorder %s159, %s161
      %p168 = scmp.eq.s32.totalorder %s23, 3
      %p169 = por %p167, %p168
      %p170 = scmp.ne.s32.totalorder %s161, %s162
      %p171 = scmp.eq.s32.totalorder %s23, 0
      %p172 = por %p170, %p171
      %p173 = scmp.ne.s32.totalorder %s161, %s162
      %p174 = scmp.eq.s32.totalorder %s24, 3
      %p175 = por %p173, %p174
      %p177 = scmp.ne.s32.totalorder %s162, %s176
      %p178 = scmp.eq.s32.totalorder %s24, 0
      %p179 = por %p177, %p178
      %s181 = sadd.s32 %s180, 1
      %p184 = scmp.eq.s32.totalorder %s18, 3
      %p185 = scmp.ne.s32.totalorder %s180, %s182
      %p186 = scmp.eq.s32.totalorder %s18, 0
      %p187 = por %p185, %p186
      %p188 = scmp.ne.s32.totalorder %s180, %s182
      %p189 = scmp.eq.s32.totalorder %s23, 3
      %p190 = por %p188, %p189
      %p191 = scmp.ne.s32.totalorder %s182, %s183
      %p192 = scmp.eq.s32.totalorder %s23, 0
      %p193 = por %p191, %p192
      %p194 = scmp.ne.s32.totalorder %s182, %s183
      %p195 = scmp.eq.s32.totalorder %s24, 3
      %p196 = por %p194, %p195
      %p198 = scmp.ne.s32.totalorder %s183, %s197
      %p199 = scmp.eq.s32.totalorder %s24, 0
      %p200 = por %p198, %p199
      %s202 = sadd.s32 %s201, 1
      %p205 = scmp.eq.s32.totalorder %s18, 3
      %p206 = scmp.ne.s32.totalorder %s201, %s203
      %p207 = scmp.eq.s32.totalorder %s18, 0
      %p208 = por %p206, %p207
      %p209 = scmp.ne.s32.totalorder %s201, %s203
      %p210 = scmp.eq.s32.totalorder %s23, 3
      %p211 = por %p209, %p210
      %p212 = scmp.ne.s32.totalorder %s203, %s204
      %p213 = scmp.eq.s32.totalorder %s23, 0
      %p214 = por %p212, %p213
      %p215 = scmp.ne.s32.totalorder %s203, %s204
      %p216 = scmp.eq.s32.totalorder %s24, 3
      %p217 = por %p215, %p216
      %p219 = scmp.ne.s32.totalorder %s204, %s218
      %p220 = scmp.eq.s32.totalorder %s24, 0
      %p221 = por %p219, %p220
      %s223 = sadd.s32 %s222, 1
      %p226 = scmp.eq.s32.totalorder %s18, 3
      %p227 = scmp.ne.s32.totalorder %s222, %s224
      %p228 = scmp.eq.s32.totalorder %s18, 0
      %p229 = por %p227, %p228
      %p230 = scmp.ne.s32.totalorder %s222, %s224
      %p231 = scmp.eq.s32.totalorder %s23, 3
      %p232 = por %p230, %p231
      %p233 = scmp.ne.s32.totalorder %s224, %s225
      %p234 = scmp.eq.s32.totalorder %s23, 0
      %p235 = por %p233, %p234
      %p236 = scmp.ne.s32.totalorder %s224, %s225
      %p237 = scmp.eq.s32.totalorder %s24, 3
      %p238 = por %p236, %p237
      %p240 = scmp.ne.s32.totalorder %s225, %s239
      %p241 = scmp.eq.s32.totalorder %s24, 0
      %p242 = por %p240, %p241
      %s244 = sadd.s32 %s243, 1
      %p247 = scmp.eq.s32.totalorder %s18, 3
      %p248 = scmp.ne.s32.totalorder %s243, %s245
      %p249 = scmp.eq.s32.totalorder %s18, 0
      %p250 = por %p248, %p249
      %p251 = scmp.ne.s32.totalorder %s243, %s245
      %p252 = scmp.eq.s32.totalorder %s23, 3
      %p253 = por %p251, %p252
      %p254 = scmp.ne.s32.totalorder %s245, %s246
      %p255 = scmp.eq.s32.totalorder %s23, 0
      %p256 = por %p254, %p255
      %p257 = scmp.ne.s32.totalorder %s245, %s246
      %p258 = scmp.eq.s32.totalorder %s24, 3
      %p259 = por %p257, %p258
      %p261 = scmp.ne.s32.totalorder %s246, %s260
      %p262 = scmp.eq.s32.totalorder %s24, 0
      %p263 = por %p261, %p262
      %s264 = ssub.s32 %s25, %s37
      %s265 = ssub.s32 %s26, %s33
      %s266 = sor.u32 %s264, %s265
      %p267 = scmp.eq.s32.totalorder %s266, 0
      %s269 = sadd.s32 %s268, 1
      %s270 = scalar_select %p267, %s268, %s269
      %p273 = pneg %p267
      %p274 = scmp.eq.s32.totalorder %s18, 3
      %p275 = por %p273, %p274
      %p276 = scmp.ne.s32.totalorder %s268, %s271
      %p277 = scmp.eq.s32.totalorder %s18, 0
      %p278 = por %p276, %p277
      %p279 = scmp.ne.s32.totalorder %s268, %s271
      %p280 = scmp.eq.s32.totalorder %s23, 3
      %p281 = por %p279, %p280
      %p282 = scmp.ne.s32.totalorder %s271, %s272
      %p283 = scmp.eq.s32.totalorder %s23, 0
      %p284 = por %p282, %p283
      %p285 = scmp.ne.s32.totalorder %s271, %s272
      %p286 = scmp.eq.s32.totalorder %s24, 3
      %p287 = por %p285, %p286
      %p289 = scmp.ne.s32.totalorder %s272, %s288
      %p290 = scmp.eq.s32.totalorder %s24, 0
      %p291 = por %p289, %p290
      %p292 = scmp.le.s32.totalorder 1, %s18
      %p293 = scmp.lt.s32.totalorder %s18, 5
      %p294 = pnand %p292, %p293
      %p295 = pneg %p294
      // Predicated region
      $region9: #{tpu_custom_call.1} parent=5 // pred_check
        _
      $region10: #{tpu_custom_call.1} parent=5 // pred_check_branch
        %297 = sbr.rel (%p294) target = $region12
      $region11: #{tpu_custom_call.1} parent=5 // pred_region
        %s298 = ssub.s32 %s18, 1
        // Predicated region
        $region13: #{tpu_custom_call.1} parent=11 // pred_check
          %p299 = pneg %p151
        $region14: #{tpu_custom_call.1} parent=11 // pred_check_branch
          %301 = sbr.rel (%p299) target = $region16
        $region15: #{tpu_custom_call.1} parent=11 // pred_region
          _
        $region16: #{tpu_custom_call.1} parent=11 // pred_fallthru
          _
        // Predicated region
        $region17: #{tpu_custom_call.1} parent=11 // pred_check
          %p302 = pneg %p172
        $region18: #{tpu_custom_call.1} parent=11 // pred_check_branch
          %304 = sbr.rel (%p302) target = $region20
        $region19: #{tpu_custom_call.1} parent=11 // pred_region
          _
        $region20: #{tpu_custom_call.1} parent=11 // pred_fallthru
          _
        // Predicated region
        $region21: #{tpu_custom_call.1} parent=11 // pred_check
          %p305 = pneg %p193
        $region22: #{tpu_custom_call.1} parent=11 // pred_check_branch
          %307 = sbr.rel (%p305) target = $region24
        $region23: #{tpu_custom_call.1} parent=11 // pred_region
          _
        $region24: #{tpu_custom_call.1} parent=11 // pred_fallthru
          _
        // Predicated region
        $region25: #{tpu_custom_call.1} parent=11 // pred_check
          %p308 = pneg %p214
        $region26: #{tpu_custom_call.1} parent=11 // pred_check_branch
          %310 = sbr.rel (%p308) target = $region28
        $region27: #{tpu_custom_call.1} parent=11 // pred_region
          _
        $region28: #{tpu_custom_call.1} parent=11 // pred_fallthru
          _
        // Predicated region
        $region29: #{tpu_custom_call.1} parent=11 // pred_check
          %p311 = pneg %p235
        $region30: #{tpu_custom_call.1} parent=11 // pred_check_branch
          %313 = sbr.rel (%p311) target = $region32
        $region31: #{tpu_custom_call.1} parent=11 // pred_region
          _
        $region32: #{tpu_custom_call.1} parent=11 // pred_fallthru
          _
        // Predicated region
        $region33: #{tpu_custom_call.1} parent=11 // pred_check
          %p314 = pneg %p256
        $region34: #{tpu_custom_call.1} parent=11 // pred_check_branch
          %316 = sbr.rel (%p314) target = $region36
        $region35: #{tpu_custom_call.1} parent=11 // pred_region
          _
        $region36: #{tpu_custom_call.1} parent=11 // pred_fallthru
          _
      $region12: #{tpu_custom_call.1} parent=5 // pred_fallthru
        _
      %p317 = scmp.lt.s32.totalorder %s18, 4
      // Predicated region
      $region37: #{tpu_custom_call.1} parent=5 // pred_check
        %p318 = pneg %p317
      $region38: #{tpu_custom_call.1} parent=5 // pred_check_branch
        %320 = sbr.rel (%p318) target = $region40
      $region39: #{tpu_custom_call.1} parent=5 // pred_region
        // Predicated region
        $region41: #{tpu_custom_call.1} parent=39 // pred_check
          %p321 = pneg %p52
        $region42: #{tpu_custom_call.1} parent=39 // pred_check_branch
          %323 = sbr.rel (%p321) target = $region44
        $region43: #{tpu_custom_call.1} parent=39 // pred_region
          %s324 = smul.u32 8, %s26
          %p325 = scmp.lt.s32.totalorder %s25, 1
          %s326 = scalar_select %p325, %s25, 1
          %p327 = scmp.lt.s32.totalorder %s324, 15
          %s328 = scalar_select %p327, %s324, 15
          %s329 = smul.addr %s328, 2
          %s330 = smul.addr %s326, 32
          %s331 = sadd.s32 %s329, %s330
          %s332 = smul.addr %s331, 4
          %s333 = scalar_lea.vmem %s0, %s332
          %s334 = smul.u32 8, %s26
        $region44: #{tpu_custom_call.1} parent=39 // pred_fallthru
          _
        // Predicated region
        $region45: #{tpu_custom_call.1} parent=39 // pred_check
          %p335 = pneg %p88
        $region46: #{tpu_custom_call.1} parent=39 // pred_check_branch
          %337 = sbr.rel (%p335) target = $region48
        $region47: #{tpu_custom_call.1} parent=39 // pred_region
          %s338 = smul.u32 %s26, 8
          %s339 = ssub.s32 %s338, 1
          %p340 = scmp.gt.s32.totalorder %s339, 0
          %s341 = scalar_select %p340, %s339, 0
          %p342 = scmp.lt.s32.totalorder %s25, 1
          %s343 = scalar_select %p342, %s25, 1
          %p344 = scmp.lt.s32.totalorder %s341, 15
          %s345 = scalar_select %p344, %s341, 15
          %s346 = smul.addr %s345, 2
          %s347 = smul.addr %s343, 32
          %s348 = sadd.s32 %s346, %s347
          %s349 = smul.addr %s348, 4
          %s350 = scalar_lea.vmem %s1, %s349
          %s351 = smul.u32 %s26, 8
          %s352 = ssub.s32 %s351, 1
          %p353 = scmp.gt.s32.totalorder %s352, 0
          %s354 = scalar_select %p353, %s352, 0
        $region48: #{tpu_custom_call.1} parent=39 // pred_fallthru
          _
        // Predicated region
        $region49: #{tpu_custom_call.1} parent=39 // pred_check
          %p355 = pneg %p124
        $region50: #{tpu_custom_call.1} parent=39 // pred_check_branch
          %357 = sbr.rel (%p355) target = $region52
        $region51: #{tpu_custom_call.1} parent=39 // pred_region
          %s358 = sadd.s32 %s26, 1
          %s359 = smul.u32 %s358, 8
          %p360 = scmp.lt.s32.totalorder %s359, 15
          %s361 = scalar_select %p360, %s359, 15
          %p362 = scmp.lt.s32.totalorder %s25, 1
          %s363 = scalar_select %p362, %s25, 1
          %p364 = scmp.lt.s32.totalorder %s361, 15
          %s365 = scalar_select %p364, %s361, 15
          %s366 = smul.addr %s365, 2
          %s367 = smul.addr %s363, 32
          %s368 = sadd.s32 %s366, %s367
          %s369 = smul.addr %s368, 4
          %s370 = scalar_lea.vmem %s2, %s369
          %s371 = sadd.s32 %s26, 1
          %s372 = smul.u32 %s371, 8
          %p373 = scmp.lt.s32.totalorder %s372, 15
          %s374 = scalar_select %p373, %s372, 15
        $region52: #{tpu_custom_call.1} parent=39 // pred_fallthru
          _
      $region40: #{tpu_custom_call.1} parent=5 // pred_fallthru
        _
      %p375 = scmp.le.s32.totalorder 1, %s18
      %p376 = scmp.lt.s32.totalorder %s18, 5
      %p377 = pnand %p375, %p376
      %p378 = pneg %p377
      // Predicated region
      $region53: #{tpu_custom_call.1} parent=5 // pred_check
        _
      $region54: #{tpu_custom_call.1} parent=5 // pred_check_branch
        %380 = sbr.rel (%p377) target = $region56
      $region55: #{tpu_custom_call.1} parent=5 // pred_region
        %s381 = ssub.s32 %s18, 1
        %s382 = smul.u32 8, %s28
        %p383 = scmp.lt.s32.totalorder %s27, 1
        %s384 = scalar_select %p383, %s27, 1
        %p385 = scmp.lt.s32.totalorder %s382, 15
        %s386 = scalar_select %p385, %s382, 15
        %s387 = smul.addr %s386, 2
        %s388 = smul.addr %s384, 32
        %s389 = sadd.s32 %s387, %s388
        %s390 = smul.addr %s389, 4
        %s391 = scalar_lea.vmem %s0, %s390
        %p392 = pneg %p58
        %p393 = pneg %p55
        %s394 = smul.u32 %s28, 8
        %s395 = ssub.s32 %s394, 1
        %p396 = scmp.gt.s32.totalorder %s395, 0
        %s397 = scalar_select %p396, %s395, 0
        %p398 = scmp.lt.s32.totalorder %s27, 1
        %s399 = scalar_select %p398, %s27, 1
        %p400 = scmp.lt.s32.totalorder %s397, 15
        %s401 = scalar_select %p400, %s397, 15
        %s402 = smul.addr %s401, 2
        %s403 = smul.addr %s399, 32
        %s404 = sadd.s32 %s402, %s403
        %s405 = smul.addr %s404, 4
        %s406 = scalar_lea.vmem %s1, %s405
        %p407 = pneg %p94
        %p408 = pneg %p91
        %s409 = sadd.s32 %s28, 1
        %s410 = smul.u32 %s409, 8
        %p411 = scmp.lt.s32.totalorder %s410, 15
        %s412 = scalar_select %p411, %s410, 15
        %p413 = scmp.lt.s32.totalorder %s27, 1
        %s414 = scalar_select %p413, %s27, 1
        %p415 = scmp.lt.s32.totalorder %s412, 15
        %s416 = scalar_select %p415, %s412, 15
        %s417 = smul.addr %s416, 2
        %s418 = smul.addr %s414, 32
        %s419 = sadd.s32 %s417, %s418
        %s420 = smul.addr %s419, 4
        %s421 = scalar_lea.vmem %s2, %s420
        %p422 = pneg %p130
        %p423 = pneg %p127
        %p424 = pneg %p151
        %p425 = pneg %p148
        %p426 = pneg %p172
        %p427 = pneg %p169
        %p428 = pneg %p193
        %p429 = pneg %p190
        %p430 = pneg %p214
        %p431 = pneg %p211
        %p432 = pneg %p235
        %p433 = pneg %p232
        %p434 = pneg %p256
        %p435 = pneg %p253
        %p436 = pneg %p284
        %p437 = pneg %p281
        %s438 = sand.u32 %s271, 1
        %s439 = scalar_lea.sflag [#allocation4], %s438
        %s440 = sand.u32 %s271, 1
        %s441 = smul.addr %s440, 64
        %s442 = scalar_lea.vmem [#allocation3], %s441
        %s443 = smul.u32 8, %s28
        %p444 = scmp.lt.s32.totalorder %s27, 1
        %s445 = scalar_select %p444, %s27, 1
        %p446 = scmp.lt.s32.totalorder %s443, 15
        %s447 = scalar_select %p446, %s443, 15
        %s448 = smul.addr %s447, 2
        %s449 = smul.addr %s445, 32
        %s450 = sadd.s32 %s448, %s449
        %s451 = smul.addr %s450, 4
        %s452 = scalar_lea.vmem %s0, %s451
        %s453 = smul.u32 8, %s28
        %s454 = smul.u32 %s28, 8
        %s455 = ssub.s32 %s454, 1
        %p456 = scmp.gt.s32.totalorder %s455, 0
        %s457 = scalar_select %p456, %s455, 0
        %p458 = scmp.lt.s32.totalorder %s27, 1
        %s459 = scalar_select %p458, %s27, 1
        %p460 = scmp.lt.s32.totalorder %s457, 15
        %s461 = scalar_select %p460, %s457, 15
        %s462 = smul.addr %s461, 2
        %s463 = smul.addr %s459, 32
        %s464 = sadd.s32 %s462, %s463
        %s465 = smul.addr %s464, 4
        %s466 = scalar_lea.vmem %s1, %s465
        %s467 = smul.u32 %s28, 8
        %s468 = ssub.s32 %s467, 1
        %p469 = scmp.gt.s32.totalorder %s468, 0
        %s470 = scalar_select %p469, %s468, 0
        %s471 = sadd.s32 %s28, 1
        %s472 = smul.u32 %s471, 8
        %p473 = scmp.lt.s32.totalorder %s472, 15
        %s474 = scalar_select %p473, %s472, 15
        %p475 = scmp.lt.s32.totalorder %s27, 1
        %s476 = scalar_select %p475, %s27, 1
        %p477 = scmp.lt.s32.totalorder %s474, 15
        %s478 = scalar_select %p477, %s474, 15
        %s479 = smul.addr %s478, 2
        %s480 = smul.addr %s476, 32
        %s481 = sadd.s32 %s479, %s480
        %s482 = smul.addr %s481, 4
        %s483 = scalar_lea.vmem %s2, %s482
        %s484 = sadd.s32 %s28, 1
        %s485 = smul.u32 %s484, 8
        %p486 = scmp.lt.s32.totalorder %s485, 15
        %s487 = scalar_select %p486, %s485, 15
        %s488 = smul.u32 8, %s28
        %v490 = vld [vmem:[%s466] sm:$0xf]
        %v491 = vld [vmem:[%s466 + $0x4] sm:$0xf]
        %v492 = vld [vmem:[%s452] sm:$0xf]
        %v493 = vld [vmem:[%s452 + $0x4] sm:$0xf]
        %v494 = vld [vmem:[%s452 + $0x8] sm:$0xf]
        %v495 = vld [vmem:[%s452 + $0xc] sm:$0xf]
        %v496 = vld [vmem:[%s452 + $0x10] sm:$0xf]
        %v497 = vld [vmem:[%s452 + $0x14] sm:$0xf]
        %v498 = vld [vmem:[%s452 + $0x18] sm:$0xf]
        %v499 = vld [vmem:[%s452 + $0x1c] sm:$0xf]
        %v500 = vld [vmem:[%s452 + $0x20] sm:$0xf]
        %v501 = vld [vmem:[%s452 + $0x24] sm:$0xf]
        %v502 = vld [vmem:[%s452 + $0x28] sm:$0xf]
        %v503 = vld [vmem:[%s452 + $0x2c] sm:$0xf]
        %v504 = vld [vmem:[%s452 + $0x30] sm:$0xf]
        %v505 = vld [vmem:[%s452 + $0x34] sm:$0xf]
        %v506 = vld [vmem:[%s452 + $0x38] sm:$0xf]
        %v507 = vld [vmem:[%s452 + $0x3c] sm:$0xf]
        %v508 = vld [vmem:[%s483] sm:$0xf]
        %v509 = vld [vmem:[%s483 + $0x4] sm:$0xf]
        %v512 = vunpack.c.l.b16 %v490
        %v513 = vunpack.c.l.b16 %v491
        %v514 = vpack.c.b16 %v513, %v512
        %v531 = vunpack.c.l.b16 %v492
        %v532 = vunpack.c.l.b16 %v493
        %v533 = vunpack.c.l.b16 %v494
        %v534 = vunpack.c.l.b16 %v495
        %v535 = vunpack.c.l.b16 %v496
        %v536 = vunpack.c.l.b16 %v497
        %v537 = vunpack.c.l.b16 %v498
        %v538 = vunpack.c.l.b16 %v499
        %v539 = vunpack.c.l.b16 %v500
        %v540 = vunpack.c.l.b16 %v501
        %v541 = vunpack.c.l.b16 %v502
        %v542 = vunpack.c.l.b16 %v503
        %v543 = vunpack.c.l.b16 %v504
        %v544 = vunpack.c.l.b16 %v505
        %v545 = vunpack.c.l.b16 %v506
        %v546 = vunpack.c.l.b16 %v507
        %v547 = vpack.c.b16 %v532, %v531
        %v548 = vpack.c.b16 %v534, %v533
        %v549 = vpack.c.b16 %v536, %v535
        %v550 = vpack.c.b16 %v538, %v537
        %v551 = vpack.c.b16 %v540, %v539
        %v552 = vpack.c.b16 %v542, %v541
        %v553 = vpack.c.b16 %v544, %v543
        %v554 = vpack.c.b16 %v546, %v545
        %v557 = vunpack.c.l.b16 %v508
        %v558 = vunpack.c.l.b16 %v509
        %v559 = vpack.c.b16 %v558, %v557
        %v560 = vld [vmem:[%s3] sm:$0x3]
        %v561 = vld [vmem:[%s4] sm:$0x1]
        %v563 = vlaneseq
        %v564 = vshrl.u32 %v563, 7
        %v565 = vsub.s32 0, %v564
        %v566 = vrot.slane %v561, %v565
        %vm568 = vcmask 31744
        %v570 = vsel %vm568, %v514, 0
        %v573 = vsel %vm568, %v547, 0
        %v576 = vsel %vm568, %v548, 0
        %v579 = vsel %vm568, %v549, 0
        %v582 = vsel %vm568, %v550, 0
        %v585 = vsel %vm568, %v551, 0
        %v588 = vsel %vm568, %v552, 0
        %v591 = vsel %vm568, %v553, 0
        %v594 = vsel %vm568, %v554, 0
        %v597 = vsel %vm568, %v559, 0
        %vm599 = vcmask 1041408
        %v601 = vsel %vm599, %v560, 0
        %603 = vmatprep.subr.bf16.mxu0 0
        %604 = vmatpush1.bf16.msra.mxu0 0
        %605 = vmatprep.subr.bf16.mxu0 0
        %606 = vmatpush1.bf16.msra.mxu0 0
        %607 = vmatprep.subr.bf16.mxu0 0
        %608 = vmatpush1.bf16.msra.mxu0 0
        %609 = vmatprep.subr.bf16.mxu0 0
        %610 = vmatpush1.bf16.msra.mxu0 0
        %611 = vmatprep.subr.bf16.mxu0 0
        %612 = vmatpush1.bf16.msra.mxu0 0
        %613 = vmatprep.subr.bf16.mxu0 0
        %614 = vmatpush1.bf16.msra.mxu0 0
        %615 = vmatprep.subr.bf16.mxu0 0
        %616 = vmatpush1.bf16.msra.mxu0 0
        %617 = vmatprep.subr.bf16.mxu0 0
        %618 = vmatpush1.bf16.msra.mxu0 %v601
        %619 = vmatprep.subr.bf16.mxu0 0
        %620 = vmatpush2.bf16.msra.mxu0 0
        %621 = vmatprep.subr.bf16.mxu0 0
        %622 = vmatpush2.bf16.msra.mxu0 0
        %623 = vmatprep.subr.bf16.mxu0 0
        %624 = vmatpush2.bf16.msra.mxu0 0
        %625 = vmatprep.subr.bf16.mxu0 0
        %626 = vmatpush2.bf16.msra.mxu0 0
        %627 = vmatprep.subr.bf16.mxu0 0
        %628 = vmatpush2.bf16.msra.mxu0 0
        %629 = vmatprep.subr.bf16.mxu0 0
        %630 = vmatpush2.bf16.msra.mxu0 0
        %631 = vmatprep.subr.bf16.mxu0 0
        %632 = vmatpush2.bf16.msra.mxu0 0
        %633 = vmatprep.subr.bf16.mxu0 0
        %634 = vmatpush2.bf16.msra.mxu0 0
        %635 = vmatprep.mubr.bf16.mxu0 0
        %636 = vmatmul.mubr.bf16.gmra.mxu0 %v570
        %v637 = vpop.f32.mrf.mxu0
        %v638 = vadd.f32 %v566, %v637
        %v639 = vpop.f32.mrf.mxu0
        %v640 = vpop.f32.mrf.mxu0
        %v641 = vadd.f32 %v566, %v640
        %v642 = vpop.f32.mrf.mxu0
        %643 = vmatprep.mubr.bf16.mxu0 0
        %644 = vmatmul.mubr.bf16.gmra.mxu0 %v573
        %v645 = vpop.f32.mrf.mxu0
        %v646 = vadd.f32 %v566, %v645
        %v647 = vpop.f32.mrf.mxu0
        %v648 = vpop.f32.mrf.mxu0
        %v649 = vadd.f32 %v566, %v648
        %v650 = vpop.f32.mrf.mxu0
        %651 = vmatprep.mubr.bf16.mxu0 0
        %652 = vmatmul.mubr.bf16.gmra.mxu0 %v576
        %v653 = vpop.f32.mrf.mxu0
        %v654 = vadd.f32 %v566, %v653
        %v655 = vpop.f32.mrf.mxu0
        %v656 = vpop.f32.mrf.mxu0
        %v657 = vadd.f32 %v566, %v656
        %v658 = vpop.f32.mrf.mxu0
        %659 = vmatprep.mubr.bf16.mxu0 0
        %660 = vmatmul.mubr.bf16.gmra.mxu0 %v579
        %v661 = vpop.f32.mrf.mxu0
        %v662 = vadd.f32 %v566, %v661
        %v663 = vpop.f32.mrf.mxu0
        %v664 = vpop.f32.mrf.mxu0
        %v665 = vadd.f32 %v566, %v664
        %v666 = vpop.f32.mrf.mxu0
        %667 = vmatprep.mubr.bf16.mxu0 0
        %668 = vmatmul.mubr.bf16.gmra.mxu0 %v582
        %v669 = vpop.f32.mrf.mxu0
        %v670 = vadd.f32 %v566, %v669
        %v671 = vpop.f32.mrf.mxu0
        %v672 = vpop.f32.mrf.mxu0
        %v673 = vadd.f32 %v566, %v672
        %v674 = vpop.f32.mrf.mxu0
        %675 = vmatprep.mubr.bf16.mxu0 0
        %676 = vmatmul.mubr.bf16.gmra.mxu0 %v585
        %v677 = vpop.f32.mrf.mxu0
        %v678 = vadd.f32 %v566, %v677
        %v679 = vpop.f32.mrf.mxu0
        %v680 = vpop.f32.mrf.mxu0
        %v681 = vadd.f32 %v566, %v680
        %v682 = vpop.f32.mrf.mxu0
        %683 = vmatprep.mubr.bf16.mxu0 0
        %684 = vmatmul.mubr.bf16.gmra.mxu0 %v588
        %v685 = vpop.f32.mrf.mxu0
        %v686 = vadd.f32 %v566, %v685
        %v687 = vpop.f32.mrf.mxu0
        %v688 = vpop.f32.mrf.mxu0
        %v689 = vadd.f32 %v566, %v688
        %v690 = vpop.f32.mrf.mxu0
        %691 = vmatprep.mubr.bf16.mxu0 0
        %692 = vmatmul.mubr.bf16.gmra.mxu0 %v591
        %v693 = vpop.f32.mrf.mxu0
        %v694 = vadd.f32 %v566, %v693
        %v695 = vpop.f32.mrf.mxu0
        %v696 = vpop.f32.mrf.mxu0
        %v697 = vadd.f32 %v566, %v696
        %v698 = vpop.f32.mrf.mxu0
        %699 = vmatprep.mubr.bf16.mxu0 0
        %700 = vmatmul.mubr.bf16.gmra.mxu0 %v594
        %v701 = vpop.f32.mrf.mxu0
        %v702 = vadd.f32 %v566, %v701
        %v703 = vpop.f32.mrf.mxu0
        %v704 = vpop.f32.mrf.mxu0
        %v705 = vadd.f32 %v566, %v704
        %v706 = vpop.f32.mrf.mxu0
        %707 = vmatprep.mubr.bf16.mxu0 0
        %708 = vmatmul.mubr.bf16.gmra.mxu0 %v597
        %v709 = vpop.f32.mrf.mxu0
        %v710 = vadd.f32 %v566, %v709
        %v711 = vpop.f32.mrf.mxu0
        %v712 = vpop.f32.mrf.mxu0
        %v713 = vadd.f32 %v566, %v712
        %v714 = vpop.f32.mrf.mxu0
        %715 = vdwg.mxu0
        %v716 = vmax.f32 %v638, 0.0
        %v717 = vmax.f32 %v641, 0.0
        %v718 = vmax.f32 %v646, 0.0
        %v719 = vmax.f32 %v649, 0.0
        %v720 = vmax.f32 %v654, 0.0
        %v721 = vmax.f32 %v657, 0.0
        %v722 = vmax.f32 %v662, 0.0
        %v723 = vmax.f32 %v665, 0.0
        %v724 = vmax.f32 %v670, 0.0
        %v725 = vmax.f32 %v673, 0.0
        %v726 = vmax.f32 %v678, 0.0
        %v727 = vmax.f32 %v681, 0.0
        %v728 = vmax.f32 %v686, 0.0
        %v729 = vmax.f32 %v689, 0.0
        %v730 = vmax.f32 %v694, 0.0
        %v731 = vmax.f32 %v697, 0.0
        %v732 = vmax.f32 %v702, 0.0
        %v733 = vmax.f32 %v705, 0.0
        %v734 = vmax.f32 %v710, 0.0
        %v735 = vmax.f32 %v713, 0.0
        %v736 = vlaneseq
        %v737 = vshrl.u32 %v736, 7
        %v738 = vadd.s32 %v737, 8
        %v739 = vadd.s32 %v737, 16
        %v740 = vadd.s32 %v737, 24
        %v741 = vadd.s32 %v737, 32
        %v742 = vadd.s32 %v737, 40
        %v743 = vadd.s32 %v737, 48
        %v744 = vadd.s32 %v737, 56
        %v745 = vadd.s32 %v737, 64
        %v746 = vadd.s32 %v737, 72
        %v747 = vadd.s32 %v737, 80
        %v748 = vadd.s32 %v737, 88
        %v749 = vadd.s32 %v737, 96
        %v750 = vadd.s32 %v737, 104
        %v751 = vadd.s32 %v737, 112
        %v752 = vadd.s32 %v737, 120
        %v753 = vadd.s32 %v737, 128
        %v754 = vadd.s32 %v737, 136
        %v755 = vadd.s32 %v737, 144
        %v756 = vadd.s32 %v737, 152
        %vm757 = vcmp.lt.s32.totalorder %v737, 16
        %vm758 = vcmp.lt.s32.totalorder %v738, 16
        %vm759 = vcmp.lt.s32.totalorder %v739, 16
        %vm760 = vcmp.lt.s32.totalorder %v740, 16
        %vm761 = vcmp.lt.s32.totalorder %v741, 16
        %vm762 = vcmp.lt.s32.totalorder %v742, 16
        %vm763 = vcmp.lt.s32.totalorder %v743, 16
        %vm764 = vcmp.lt.s32.totalorder %v744, 16
        %vm765 = vcmp.lt.s32.totalorder %v745, 16
        %vm766 = vcmp.lt.s32.totalorder %v746, 16
        %vm767 = vcmp.lt.s32.totalorder %v747, 16
        %vm768 = vcmp.lt.s32.totalorder %v748, 16
        %vm769 = vcmp.lt.s32.totalorder %v749, 16
        %vm770 = vcmp.lt.s32.totalorder %v750, 16
        %vm771 = vcmp.lt.s32.totalorder %v751, 16
        %vm772 = vcmp.lt.s32.totalorder %v752, 16
        %vm773 = vcmp.lt.s32.totalorder %v753, 16
        %vm774 = vcmp.lt.s32.totalorder %v754, 16
        %vm775 = vcmp.lt.s32.totalorder %v755, 16
        %vm776 = vcmp.lt.s32.totalorder %v756, 16
        %p777 = scmp.eq.s32.totalorder %s28, 0
        %s778 = scalar_select %p777, 1, 0
        %v779 = vstv %s778
        %vm780 = vcmp.eq.s32.totalorder %v779, 1
        %vm781 = vmand %vm757, %vm780
        %vm782 = vmand %vm758, %vm780
        %vm783 = vmand %vm759, %vm780
        %vm784 = vmand %vm760, %vm780
        %vm785 = vmand %vm761, %vm780
        %vm786 = vmand %vm762, %vm780
        %vm787 = vmand %vm763, %vm780
        %vm788 = vmand %vm764, %vm780
        %vm789 = vmand %vm765, %vm780
        %vm790 = vmand %vm766, %vm780
        %vm791 = vmand %vm767, %vm780
        %vm792 = vmand %vm768, %vm780
        %vm793 = vmand %vm769, %vm780
        %vm794 = vmand %vm770, %vm780
        %vm795 = vmand %vm771, %vm780
        %vm796 = vmand %vm772, %vm780
        %vm797 = vmand %vm773, %vm780
        %vm798 = vmand %vm774, %vm780
        %vm799 = vmand %vm775, %vm780
        %vm800 = vmand %vm776, %vm780
        %v801 = vsel %vm781, 1, 0
        %v802 = vsel %vm782, 1, 0
        %v803 = vsel %vm783, 1, 0
        %v804 = vsel %vm784, 1, 0
        %v805 = vsel %vm785, 1, 0
        %v806 = vsel %vm786, 1, 0
        %v807 = vsel %vm787, 1, 0
        %v808 = vsel %vm788, 1, 0
        %v809 = vsel %vm789, 1, 0
        %v810 = vsel %vm790, 1, 0
        %v811 = vsel %vm791, 1, 0
        %v812 = vsel %vm792, 1, 0
        %v813 = vsel %vm793, 1, 0
        %v814 = vsel %vm794, 1, 0
        %v815 = vsel %vm795, 1, 0
        %v816 = vsel %vm796, 1, 0
        %v817 = vsel %vm797, 1, 0
        %v818 = vsel %vm798, 1, 0
        %v819 = vsel %vm799, 1, 0
        %v820 = vsel %vm800, 1, 0
        %vm821 = vcmp.eq.s32.totalorder %v801, 1
        %vm822 = vcmp.eq.s32.totalorder %v802, 1
        %vm823 = vcmp.eq.s32.totalorder %v803, 1
        %vm824 = vcmp.eq.s32.totalorder %v804, 1
        %vm825 = vcmp.eq.s32.totalorder %v805, 1
        %vm826 = vcmp.eq.s32.totalorder %v806, 1
        %vm827 = vcmp.eq.s32.totalorder %v807, 1
        %vm828 = vcmp.eq.s32.totalorder %v808, 1
        %vm829 = vcmp.eq.s32.totalorder %v809, 1
        %vm830 = vcmp.eq.s32.totalorder %v810, 1
        %vm831 = vcmp.eq.s32.totalorder %v811, 1
        %vm832 = vcmp.eq.s32.totalorder %v812, 1
        %vm833 = vcmp.eq.s32.totalorder %v813, 1
        %vm834 = vcmp.eq.s32.totalorder %v814, 1
        %vm835 = vcmp.eq.s32.totalorder %v815, 1
        %vm836 = vcmp.eq.s32.totalorder %v816, 1
        %vm837 = vcmp.eq.s32.totalorder %v817, 1
        %vm838 = vcmp.eq.s32.totalorder %v818, 1
        %vm839 = vcmp.eq.s32.totalorder %v819, 1
        %vm840 = vcmp.eq.s32.totalorder %v820, 1
        %v841 = vsel %vm821, 0.0, %v716
        %v842 = vsel %vm822, 0.0, %v717
        %v843 = vsel %vm823, 0.0, %v718
        %v844 = vsel %vm824, 0.0, %v719
        %v845 = vsel %vm825, 0.0, %v720
        %v846 = vsel %vm826, 0.0, %v721
        %v847 = vsel %vm827, 0.0, %v722
        %v848 = vsel %vm828, 0.0, %v723
        %v849 = vsel %vm829, 0.0, %v724
        %v850 = vsel %vm830, 0.0, %v725
        %v851 = vsel %vm831, 0.0, %v726
        %v852 = vsel %vm832, 0.0, %v727
        %v853 = vsel %vm833, 0.0, %v728
        %v854 = vsel %vm834, 0.0, %v729
        %v855 = vsel %vm835, 0.0, %v730
        %v856 = vsel %vm836, 0.0, %v731
        %v857 = vsel %vm837, 0.0, %v732
        %v858 = vsel %vm838, 0.0, %v733
        %v859 = vsel %vm839, 0.0, %v734
        %v860 = vsel %vm840, 0.0, %v735
        %vm861 = vcmp.ge.s32.totalorder %v737, 144
        %vm862 = vcmp.ge.s32.totalorder %v738, 144
        %vm863 = vcmp.ge.s32.totalorder %v739, 144
        %vm864 = vcmp.ge.s32.totalorder %v740, 144
        %vm865 = vcmp.ge.s32.totalorder %v741, 144
        %vm866 = vcmp.ge.s32.totalorder %v742, 144
        %vm867 = vcmp.ge.s32.totalorder %v743, 144
        %vm868 = vcmp.ge.s32.totalorder %v744, 144
        %vm869 = vcmp.ge.s32.totalorder %v745, 144
        %vm870 = vcmp.ge.s32.totalorder %v746, 144
        %vm871 = vcmp.ge.s32.totalorder %v747, 144
        %vm872 = vcmp.ge.s32.totalorder %v748, 144
        %vm873 = vcmp.ge.s32.totalorder %v749, 144
        %vm874 = vcmp.ge.s32.totalorder %v750, 144
        %vm875 = vcmp.ge.s32.totalorder %v751, 144
        %vm876 = vcmp.ge.s32.totalorder %v752, 144
        %vm877 = vcmp.ge.s32.totalorder %v753, 144
        %vm878 = vcmp.ge.s32.totalorder %v754, 144
        %vm879 = vcmp.ge.s32.totalorder %v755, 144
        %vm880 = vcmp.ge.s32.totalorder %v756, 144
        %p881 = scmp.eq.s32.totalorder %s28, 1
        %s882 = scalar_select %p881, 1, 0
        %v883 = vstv %s882
        %vm884 = vcmp.eq.s32.totalorder %v883, 1
        %vm885 = vmand %vm861, %vm884
        %vm886 = vmand %vm862, %vm884
        %vm887 = vmand %vm863, %vm884
        %vm888 = vmand %vm864, %vm884
        %vm889 = vmand %vm865, %vm884
        %vm890 = vmand %vm866, %vm884
        %vm891 = vmand %vm867, %vm884
        %vm892 = vmand %vm868, %vm884
        %vm893 = vmand %vm869, %vm884
        %vm894 = vmand %vm870, %vm884
        %vm895 = vmand %vm871, %vm884
        %vm896 = vmand %vm872, %vm884
        %vm897 = vmand %vm873, %vm884
        %vm898 = vmand %vm874, %vm884
        %vm899 = vmand %vm875, %vm884
        %vm900 = vmand %vm876, %vm884
        %vm901 = vmand %vm877, %vm884
        %vm902 = vmand %vm878, %vm884
        %vm903 = vmand %vm879, %vm884
        %vm904 = vmand %vm880, %vm884
        %v905 = vsel %vm885, 1, 0
        %v906 = vsel %vm886, 1, 0
        %v907 = vsel %vm887, 1, 0
        %v908 = vsel %vm888, 1, 0
        %v909 = vsel %vm889, 1, 0
        %v910 = vsel %vm890, 1, 0
        %v911 = vsel %vm891, 1, 0
        %v912 = vsel %vm892, 1, 0
        %v913 = vsel %vm893, 1, 0
        %v914 = vsel %vm894, 1, 0
        %v915 = vsel %vm895, 1, 0
        %v916 = vsel %vm896, 1, 0
        %v917 = vsel %vm897, 1, 0
        %v918 = vsel %vm898, 1, 0
        %v919 = vsel %vm899, 1, 0
        %v920 = vsel %vm900, 1, 0
        %v921 = vsel %vm901, 1, 0
        %v922 = vsel %vm902, 1, 0
        %v923 = vsel %vm903, 1, 0
        %v924 = vsel %vm904, 1, 0
        %vm925 = vcmp.eq.s32.totalorder %v905, 1
        %vm926 = vcmp.eq.s32.totalorder %v906, 1
        %vm927 = vcmp.eq.s32.totalorder %v907, 1
        %vm928 = vcmp.eq.s32.totalorder %v908, 1
        %vm929 = vcmp.eq.s32.totalorder %v909, 1
        %vm930 = vcmp.eq.s32.totalorder %v910, 1
        %vm931 = vcmp.eq.s32.totalorder %v911, 1
        %vm932 = vcmp.eq.s32.totalorder %v912, 1
        %vm933 = vcmp.eq.s32.totalorder %v913, 1
        %vm934 = vcmp.eq.s32.totalorder %v914, 1
        %vm935 = vcmp.eq.s32.totalorder %v915, 1
        %vm936 = vcmp.eq.s32.totalorder %v916, 1
        %vm937 = vcmp.eq.s32.totalorder %v917, 1
        %vm938 = vcmp.eq.s32.totalorder %v918, 1
        %vm939 = vcmp.eq.s32.totalorder %v919, 1
        %vm940 = vcmp.eq.s32.totalorder %v920, 1
        %vm941 = vcmp.eq.s32.totalorder %v921, 1
        %vm942 = vcmp.eq.s32.totalorder %v922, 1
        %vm943 = vcmp.eq.s32.totalorder %v923, 1
        %vm944 = vcmp.eq.s32.totalorder %v924, 1
        %v945 = vsel %vm925, 0.0, %v841
        %v946 = vsel %vm926, 0.0, %v842
        %v947 = vsel %vm927, 0.0, %v843
        %v948 = vsel %vm928, 0.0, %v844
        %v949 = vsel %vm929, 0.0, %v845
        %v950 = vsel %vm930, 0.0, %v846
        %v951 = vsel %vm931, 0.0, %v847
        %v952 = vsel %vm932, 0.0, %v848
        %v953 = vsel %vm933, 0.0, %v849
        %v954 = vsel %vm934, 0.0, %v850
        %v955 = vsel %vm935, 0.0, %v851
        %v956 = vsel %vm936, 0.0, %v852
        %v957 = vsel %vm937, 0.0, %v853
        %v958 = vsel %vm938, 0.0, %v854
        %v959 = vsel %vm939, 0.0, %v855
        %v960 = vsel %vm940, 0.0, %v856
        %v961 = vsel %vm941, 0.0, %v857
        %v962 = vsel %vm942, 0.0, %v858
        %v963 = vsel %vm943, 0.0, %v859
        %v964 = vsel %vm944, 0.0, %v860
        %v965 = vpack.c.bf16 %v946, %v945
        %v966 = vpack.c.bf16 %v948, %v947
        %v967 = vpack.c.bf16 %v950, %v949
        %v968 = vpack.c.bf16 %v952, %v951
        %v969 = vpack.c.bf16 %v954, %v953
        %v970 = vpack.c.bf16 %v956, %v955
        %v971 = vpack.c.bf16 %v958, %v957
        %v972 = vpack.c.bf16 %v960, %v959
        %v973 = vpack.c.bf16 %v962, %v961
        %v974 = vpack.c.bf16 %v964, %v963
        %v975 = vld [vmem:[%s5] sm:$0x7]
        %v976 = vld [vmem:[%s6] sm:$0x1]
        %v978 = vlaneseq
        %v979 = vshrl.u32 %v978, 7
        %v980 = vsub.s32 0, %v979
        %v981 = vrot.slane %v976, %v980
        %vm983 = vcmask 48128
        %v985 = vsel %vm983, %v966, 0
        %v988 = vsel %vm983, %v967, 0
        %v991 = vsel %vm983, %v968, 0
        %v994 = vsel %vm983, %v969, 0
        %v997 = vsel %vm983, %v970, 0
        %v1000 = vsel %vm983, %v971, 0
        %v1003 = vsel %vm983, %v972, 0
        %v1006 = vsel %vm983, %v973, 0
        %vm1008 = vcmask 1042432
        %v1010 = vsel %vm1008, %v975, 0
        %1012 = vmatprep.subr.bf16.mxu0 0
        %1013 = vmatpush1.bf16.msra.mxu0 0
        %1014 = vmatprep.subr.bf16.mxu0 0
        %1015 = vmatpush1.bf16.msra.mxu0 0
        %1016 = vmatprep.subr.bf16.mxu0 0
        %1017 = vmatpush1.bf16.msra.mxu0 0
        %1018 = vmatprep.subr.bf16.mxu0 0
        %1019 = vmatpush1.bf16.msra.mxu0 0
        %1020 = vmatprep.subr.bf16.mxu0 0
        %1021 = vmatpush1.bf16.msra.mxu0 0
        %1022 = vmatprep.subr.bf16.mxu0 0
        %1023 = vmatpush1.bf16.msra.mxu0 0
        %1024 = vmatprep.subr.bf16.mxu0 0
        %1025 = vmatpush1.bf16.msra.mxu0 0
        %1026 = vmatprep.subr.bf16.mxu0 0
        %1027 = vmatpush1.bf16.msra.mxu0 %v1010
        %1028 = vmatprep.subr.bf16.mxu0 0
        %1029 = vmatpush2.bf16.msra.mxu0 0
        %1030 = vmatprep.subr.bf16.mxu0 0
        %1031 = vmatpush2.bf16.msra.mxu0 0
        %1032 = vmatprep.subr.bf16.mxu0 0
        %1033 = vmatpush2.bf16.msra.mxu0 0
        %1034 = vmatprep.subr.bf16.mxu0 0
        %1035 = vmatpush2.bf16.msra.mxu0 0
        %1036 = vmatprep.subr.bf16.mxu0 0
        %1037 = vmatpush2.bf16.msra.mxu0 0
        %1038 = vmatprep.subr.bf16.mxu0 0
        %1039 = vmatpush2.bf16.msra.mxu0 0
        %1040 = vmatprep.subr.bf16.mxu0 0
        %1041 = vmatpush2.bf16.msra.mxu0 0
        %1042 = vmatprep.subr.bf16.mxu0 0
        %1043 = vmatpush2.bf16.msra.mxu0 0
        %1044 = vmatprep.mubr.bf16.mxu0 0
        %1045 = vmatmul.mubr.bf16.gmra.mxu0 %v985
        %v1046 = vpop.f32.mrf.mxu0
        %v1047 = vadd.f32 %v981, %v1046
        %v1048 = vpop.f32.mrf.mxu0
        %v1049 = vpop.f32.mrf.mxu0
        %v1050 = vadd.f32 %v981, %v1049
        %v1051 = vpop.f32.mrf.mxu0
        %1052 = vmatprep.mubr.bf16.mxu0 0
        %1053 = vmatmul.mubr.bf16.gmra.mxu0 %v988
        %v1054 = vpop.f32.mrf.mxu0
        %v1055 = vadd.f32 %v981, %v1054
        %v1056 = vpop.f32.mrf.mxu0
        %v1057 = vpop.f32.mrf.mxu0
        %v1058 = vadd.f32 %v981, %v1057
        %v1059 = vpop.f32.mrf.mxu0
        %1060 = vmatprep.mubr.bf16.mxu0 0
        %1061 = vmatmul.mubr.bf16.gmra.mxu0 %v991
        %v1062 = vpop.f32.mrf.mxu0
        %v1063 = vadd.f32 %v981, %v1062
        %v1064 = vpop.f32.mrf.mxu0
        %v1065 = vpop.f32.mrf.mxu0
        %v1066 = vadd.f32 %v981, %v1065
        %v1067 = vpop.f32.mrf.mxu0
        %1068 = vmatprep.mubr.bf16.mxu0 0
        %1069 = vmatmul.mubr.bf16.gmra.mxu0 %v994
        %v1070 = vpop.f32.mrf.mxu0
        %v1071 = vadd.f32 %v981, %v1070
        %v1072 = vpop.f32.mrf.mxu0
        %v1073 = vpop.f32.mrf.mxu0
        %v1074 = vadd.f32 %v981, %v1073
        %v1075 = vpop.f32.mrf.mxu0
        %1076 = vmatprep.mubr.bf16.mxu0 0
        %1077 = vmatmul.mubr.bf16.gmra.mxu0 %v997
        %v1078 = vpop.f32.mrf.mxu0
        %v1079 = vadd.f32 %v981, %v1078
        %v1080 = vpop.f32.mrf.mxu0
        %v1081 = vpop.f32.mrf.mxu0
        %v1082 = vadd.f32 %v981, %v1081
        %v1083 = vpop.f32.mrf.mxu0
        %1084 = vmatprep.mubr.bf16.mxu0 0
        %1085 = vmatmul.mubr.bf16.gmra.mxu0 %v1000
        %v1086 = vpop.f32.mrf.mxu0
        %v1087 = vadd.f32 %v981, %v1086
        %v1088 = vpop.f32.mrf.mxu0
        %v1089 = vpop.f32.mrf.mxu0
        %v1090 = vadd.f32 %v981, %v1089
        %v1091 = vpop.f32.mrf.mxu0
        %1092 = vmatprep.mubr.bf16.mxu0 0
        %1093 = vmatmul.mubr.bf16.gmra.mxu0 %v1003
        %v1094 = vpop.f32.mrf.mxu0
        %v1095 = vadd.f32 %v981, %v1094
        %v1096 = vpop.f32.mrf.mxu0
        %v1097 = vpop.f32.mrf.mxu0
        %v1098 = vadd.f32 %v981, %v1097
        %v1099 = vpop.f32.mrf.mxu0
        %1100 = vmatprep.mubr.bf16.mxu0 0
        %1101 = vmatmul.mubr.bf16.gmra.mxu0 %v1006
        %v1102 = vpop.f32.mrf.mxu0
        %v1103 = vadd.f32 %v981, %v1102
        %v1104 = vpop.f32.mrf.mxu0
        %v1105 = vpop.f32.mrf.mxu0
        %v1106 = vadd.f32 %v981, %v1105
        %v1107 = vpop.f32.mrf.mxu0
        %1108 = vdwg.mxu0
        %v1109 = vmax.f32 %v1047, 0.0
        %v1110 = vmax.f32 %v1050, 0.0
        %v1111 = vmax.f32 %v1055, 0.0
        %v1112 = vmax.f32 %v1058, 0.0
        %v1113 = vmax.f32 %v1063, 0.0
        %v1114 = vmax.f32 %v1066, 0.0
        %v1115 = vmax.f32 %v1071, 0.0
        %v1116 = vmax.f32 %v1074, 0.0
        %v1117 = vmax.f32 %v1079, 0.0
        %v1118 = vmax.f32 %v1082, 0.0
        %v1119 = vmax.f32 %v1087, 0.0
        %v1120 = vmax.f32 %v1090, 0.0
        %v1121 = vmax.f32 %v1095, 0.0
        %v1122 = vmax.f32 %v1098, 0.0
        %v1123 = vmax.f32 %v1103, 0.0
        %v1124 = vmax.f32 %v1106, 0.0
        %vm1125 = vcmask 40960
        %vm1126 = vsmask.f32 256
        %vm1127 = vmand %vm1125, %vm1126
        %v1128 = vld [vmem:[#allocation2] sm:$0x1]
        %v1129 = vsel %vm1127, 0, %v1128
        %1130 = vst [vmem:[#allocation2] sm:$0x1] %v1129
        %v1131 = vld [vmem:[#allocation2 + $0x8] sm:$0x1]
        %v1132 = vsel %vm1127, 0, %v1131
        %1133 = vst [vmem:[#allocation2 + $0x8] sm:$0x1] %v1132
        %v1134 = vld [vmem:[#allocation2 + $0x10] sm:$0x1]
        %v1135 = vsel %vm1127, 0, %v1134
        %1136 = vst [vmem:[#allocation2 + $0x10] sm:$0x1] %v1135
        %v1137 = vld [vmem:[#allocation2 + $0x18] sm:$0x1]
        %v1138 = vsel %vm1127, 0, %v1137
        %1139 = vst [vmem:[#allocation2 + $0x18] sm:$0x1] %v1138
        %v1140 = vld [vmem:[#allocation2 + $0x20] sm:$0x1]
        %v1141 = vsel %vm1127, 0, %v1140
        %1142 = vst [vmem:[#allocation2 + $0x20] sm:$0x1] %v1141
        %v1143 = vld [vmem:[#allocation2 + $0x28] sm:$0x1]
        %v1144 = vsel %vm1127, 0, %v1143
        %1145 = vst [vmem:[#allocation2 + $0x28] sm:$0x1] %v1144
        %v1146 = vld [vmem:[#allocation2 + $0x30] sm:$0x1]
        %v1147 = vsel %vm1127, 0, %v1146
        %1148 = vst [vmem:[#allocation2 + $0x30] sm:$0x1] %v1147
        %v1149 = vld [vmem:[#allocation2 + $0x38] sm:$0x1]
        %v1150 = vsel %vm1127, 0, %v1149
        %1151 = vst [vmem:[#allocation2 + $0x38] sm:$0x1] %v1150
        %v1160 = vunpack.c.l.b16 %v965
        %v1161 = vunpack.c.h.b16 %v965
        %v1162 = vunpack.c.l.b16 %v966
        %v1163 = vunpack.c.h.b16 %v966
        %v1164 = vunpack.c.l.b16 %v967
        %v1165 = vunpack.c.h.b16 %v967
        %v1166 = vunpack.c.l.b16 %v968
        %v1167 = vunpack.c.h.b16 %v968
        %v1168 = vunpack.c.l.b16 %v969
        %v1169 = vunpack.c.h.b16 %v969
        %v1170 = vunpack.c.l.b16 %v970
        %v1171 = vunpack.c.h.b16 %v970
        %v1172 = vunpack.c.l.b16 %v971
        %v1173 = vunpack.c.h.b16 %v971
        %v1174 = vunpack.c.l.b16 %v972
        %v1175 = vunpack.c.h.b16 %v972
        %v1176 = vpack.c.b16 %v1160, %v1160
        %v1177 = vpack.c.b16 %v1161, %v1161
        %v1178 = vpack.c.b16 %v1162, %v1162
        %v1179 = vpack.c.b16 %v1163, %v1163
        %v1180 = vpack.c.b16 %v1164, %v1164
        %v1181 = vpack.c.b16 %v1165, %v1165
        %v1182 = vpack.c.b16 %v1166, %v1166
        %v1183 = vpack.c.b16 %v1167, %v1167
        %v1184 = vpack.c.b16 %v1168, %v1168
        %v1185 = vpack.c.b16 %v1169, %v1169
        %v1186 = vpack.c.b16 %v1170, %v1170
        %v1187 = vpack.c.b16 %v1171, %v1171
        %v1188 = vpack.c.b16 %v1172, %v1172
        %v1189 = vpack.c.b16 %v1173, %v1173
        %v1190 = vpack.c.b16 %v1174, %v1174
        %v1191 = vpack.c.b16 %v1175, %v1175
        %vm1192 = vsmask.f32 4368
        %vm1193 = vmor %vm1126, %vm1192
        %v1195 = vshrl.u32 %v1176, 16
        %v1197 = vrot.slane %v1195, 7
        %v1198 = vshll.u32 %v1176, 16
        %v1200 = vor.u32 %v1197, %v1198
        %v1201 = vrot.slane %v1197, 4
        %v1203 = vshrl.u32 %v1177, 16
        %v1205 = vrot.slane %v1203, 7
        %v1206 = vshll.u32 %v1177, 16
        %v1208 = vor.u32 %v1205, %v1206
        %v1209 = vsel %vm1193, %v1201, %v1208
        %v1211 = vshrl.u32 %v1178, 16
        %v1213 = vrot.slane %v1211, 7
        %v1214 = vshll.u32 %v1178, 16
        %v1216 = vor.u32 %v1213, %v1214
        %v1217 = vrot.slane %v1213, 4
        %v1219 = vshrl.u32 %v1179, 16
        %v1221 = vrot.slane %v1219, 7
        %v1222 = vshll.u32 %v1179, 16
        %v1224 = vor.u32 %v1221, %v1222
        %v1225 = vsel %vm1193, %v1217, %v1224
        %v1227 = vshrl.u32 %v1180, 16
        %v1229 = vrot.slane %v1227, 7
        %v1230 = vshll.u32 %v1180, 16
        %v1232 = vor.u32 %v1229, %v1230
        %v1233 = vrot.slane %v1229, 4
        %v1235 = vshrl.u32 %v1181, 16
        %v1237 = vrot.slane %v1235, 7
        %v1238 = vshll.u32 %v1181, 16
        %v1240 = vor.u32 %v1237, %v1238
        %v1241 = vsel %vm1193, %v1233, %v1240
        %v1243 = vshrl.u32 %v1182, 16
        %v1245 = vrot.slane %v1243, 7
        %v1246 = vshll.u32 %v1182, 16
        %v1248 = vor.u32 %v1245, %v1246
        %v1249 = vrot.slane %v1245, 4
        %v1251 = vshrl.u32 %v1183, 16
        %v1253 = vrot.slane %v1251, 7
        %v1254 = vshll.u32 %v1183, 16
        %v1256 = vor.u32 %v1253, %v1254
        %v1257 = vsel %vm1193, %v1249, %v1256
        %v1259 = vshrl.u32 %v1184, 16
        %v1261 = vrot.slane %v1259, 7
        %v1262 = vshll.u32 %v1184, 16
        %v1264 = vor.u32 %v1261, %v1262
        %v1265 = vrot.slane %v1261, 4
        %v1267 = vshrl.u32 %v1185, 16
        %v1269 = vrot.slane %v1267, 7
        %v1270 = vshll.u32 %v1185, 16
        %v1272 = vor.u32 %v1269, %v1270
        %v1273 = vsel %vm1193, %v1265, %v1272
        %v1275 = vshrl.u32 %v1186, 16
        %v1277 = vrot.slane %v1275, 7
        %v1278 = vshll.u32 %v1186, 16
        %v1280 = vor.u32 %v1277, %v1278
        %v1281 = vrot.slane %v1277, 4
        %v1283 = vshrl.u32 %v1187, 16
        %v1285 = vrot.slane %v1283, 7
        %v1286 = vshll.u32 %v1187, 16
        %v1288 = vor.u32 %v1285, %v1286
        %v1289 = vsel %vm1193, %v1281, %v1288
        %v1291 = vshrl.u32 %v1188, 16
        %v1293 = vrot.slane %v1291, 7
        %v1294 = vshll.u32 %v1188, 16
        %v1296 = vor.u32 %v1293, %v1294
        %v1297 = vrot.slane %v1293, 4
        %v1299 = vshrl.u32 %v1189, 16
        %v1301 = vrot.slane %v1299, 7
        %v1302 = vshll.u32 %v1189, 16
        %v1304 = vor.u32 %v1301, %v1302
        %v1305 = vsel %vm1193, %v1297, %v1304
        %v1307 = vshrl.u32 %v1190, 16
        %v1309 = vrot.slane %v1307, 7
        %v1310 = vshll.u32 %v1190, 16
        %v1312 = vor.u32 %v1309, %v1310
        %v1313 = vrot.slane %v1309, 4
        %v1315 = vshrl.u32 %v1191, 16
        %v1317 = vrot.slane %v1315, 7
        %v1318 = vshll.u32 %v1191, 16
        %v1320 = vor.u32 %v1317, %v1318
        %v1321 = vsel %vm1193, %v1313, %v1320
        %vm1338 = vcmask 44032
        %vm1339 = vsmask.f32 7938
        %vm1340 = vmand %vm1338, %vm1339
        %v1341 = vld [vmem:[#allocation2] sm:$0xf]
        %v1342 = vsel %vm1340, %v1200, %v1341
        %1343 = vst [vmem:[#allocation2] sm:$0xf] %v1342
        %vm1344 = vcmask 44032
        %1345 = vst.msk [vmem:[#allocation2 + $0x4] sm:$0xf] %vm1344, %v1209
        %v1346 = vld [vmem:[#allocation2 + $0x8] sm:$0xf]
        %v1347 = vsel %vm1340, %v1216, %v1346
        %1348 = vst [vmem:[#allocation2 + $0x8] sm:$0xf] %v1347
        %1349 = vst.msk [vmem:[#allocation2 + $0xc] sm:$0xf] %vm1344, %v1225
        %v1350 = vld [vmem:[#allocation2 + $0x10] sm:$0xf]
        %v1351 = vsel %vm1340, %v1232, %v1350
        %1352 = vst [vmem:[#allocation2 + $0x10] sm:$0xf] %v1351
        %1353 = vst.msk [vmem:[#allocation2 + $0x14] sm:$0xf] %vm1344, %v1241
        %v1354 = vld [vmem:[#allocation2 + $0x18] sm:$0xf]
        %v1355 = vsel %vm1340, %v1248, %v1354
        %1356 = vst [vmem:[#allocation2 + $0x18] sm:$0xf] %v1355
        %1357 = vst.msk [vmem:[#allocation2 + $0x1c] sm:$0xf] %vm1344, %v1257
        %v1358 = vld [vmem:[#allocation2 + $0x20] sm:$0xf]
        %v1359 = vsel %vm1340, %v1264, %v1358
        %1360 = vst [vmem:[#allocation2 + $0x20] sm:$0xf] %v1359
        %1361 = vst.msk [vmem:[#allocation2 + $0x24] sm:$0xf] %vm1344, %v1273
        %v1362 = vld [vmem:[#allocation2 + $0x28] sm:$0xf]
        %v1363 = vsel %vm1340, %v1280, %v1362
        %1364 = vst [vmem:[#allocation2 + $0x28] sm:$0xf] %v1363
        %1365 = vst.msk [vmem:[#allocation2 + $0x2c] sm:$0xf] %vm1344, %v1289
        %v1366 = vld [vmem:[#allocation2 + $0x30] sm:$0xf]
        %v1367 = vsel %vm1340, %v1296, %v1366
        %1368 = vst [vmem:[#allocation2 + $0x30] sm:$0xf] %v1367
        %1369 = vst.msk [vmem:[#allocation2 + $0x34] sm:$0xf] %vm1344, %v1305
        %v1370 = vld [vmem:[#allocation2 + $0x38] sm:$0xf]
        %v1371 = vsel %vm1340, %v1312, %v1370
        %1372 = vst [vmem:[#allocation2 + $0x38] sm:$0xf] %v1371
        %1373 = vst.msk [vmem:[#allocation2 + $0x3c] sm:$0xf] %vm1344, %v1321
        %1374 = vrot.lane.b32.xlu0 %v1176, 6
        %v1375 = vpop.permute.xlu0 %1374
        %1376 = vrot.lane.b32.xlu0 %v1177, 6
        %v1377 = vpop.permute.xlu0 %1376
        %1378 = vrot.lane.b32.xlu0 %v1178, 6
        %v1379 = vpop.permute.xlu0 %1378
        %1380 = vrot.lane.b32.xlu0 %v1179, 6
        %v1381 = vpop.permute.xlu0 %1380
        %1382 = vrot.lane.b32.xlu0 %v1180, 6
        %v1383 = vpop.permute.xlu0 %1382
        %1384 = vrot.lane.b32.xlu0 %v1181, 6
        %v1385 = vpop.permute.xlu0 %1384
        %1386 = vrot.lane.b32.xlu0 %v1182, 6
        %v1387 = vpop.permute.xlu0 %1386
        %1388 = vrot.lane.b32.xlu0 %v1183, 6
        %v1389 = vpop.permute.xlu0 %1388
        %1390 = vrot.lane.b32.xlu0 %v1184, 6
        %v1391 = vpop.permute.xlu0 %1390
        %1392 = vrot.lane.b32.xlu0 %v1185, 6
        %v1393 = vpop.permute.xlu0 %1392
        %1394 = vrot.lane.b32.xlu0 %v1186, 6
        %v1395 = vpop.permute.xlu0 %1394
        %1396 = vrot.lane.b32.xlu0 %v1187, 6
        %v1397 = vpop.permute.xlu0 %1396
        %1398 = vrot.lane.b32.xlu0 %v1188, 6
        %v1399 = vpop.permute.xlu0 %1398
        %1400 = vrot.lane.b32.xlu0 %v1189, 6
        %v1401 = vpop.permute.xlu0 %1400
        %1402 = vrot.lane.b32.xlu0 %v1190, 6
        %v1403 = vpop.permute.xlu0 %1402
        %1404 = vrot.lane.b32.xlu0 %v1191, 6
        %v1405 = vpop.permute.xlu0 %1404
        %vm1422 = vcmask 93232
        %1423 = vst.msk [vmem:[#allocation2] sm:$0xf] %vm1422, %v1375
        %1424 = vst.msk [vmem:[#allocation2 + $0x4] sm:$0xf] %vm1422, %v1377
        %1425 = vst.msk [vmem:[#allocation2 + $0x8] sm:$0xf] %vm1422, %v1379
        %1426 = vst.msk [vmem:[#allocation2 + $0xc] sm:$0xf] %vm1422, %v1381
        %1427 = vst.msk [vmem:[#allocation2 + $0x10] sm:$0xf] %vm1422, %v1383
        %1428 = vst.msk [vmem:[#allocation2 + $0x14] sm:$0xf] %vm1422, %v1385
        %1429 = vst.msk [vmem:[#allocation2 + $0x18] sm:$0xf] %vm1422, %v1387
        %1430 = vst.msk [vmem:[#allocation2 + $0x1c] sm:$0xf] %vm1422, %v1389
        %1431 = vst.msk [vmem:[#allocation2 + $0x20] sm:$0xf] %vm1422, %v1391
        %1432 = vst.msk [vmem:[#allocation2 + $0x24] sm:$0xf] %vm1422, %v1393
        %1433 = vst.msk [vmem:[#allocation2 + $0x28] sm:$0xf] %vm1422, %v1395
        %1434 = vst.msk [vmem:[#allocation2 + $0x2c] sm:$0xf] %vm1422, %v1397
        %1435 = vst.msk [vmem:[#allocation2 + $0x30] sm:$0xf] %vm1422, %v1399
        %1436 = vst.msk [vmem:[#allocation2 + $0x34] sm:$0xf] %vm1422, %v1401
        %1437 = vst.msk [vmem:[#allocation2 + $0x38] sm:$0xf] %vm1422, %v1403
        %1438 = vst.msk [vmem:[#allocation2 + $0x3c] sm:$0xf] %vm1422, %v1405
        %vm1439 = vsmask.f32 3328
        %vm1440 = vsmask.f32 7440
        %vm1441 = vmor %vm1439, %vm1440
        %v1442 = vrot.slane %v1195, 4
        %v1443 = vrot.slane %v1198, 5
        %v1444 = vor.u32 %v1442, %v1443
        %v1445 = vrot.slane %v1444, 4
        %v1446 = vrot.slane %v1206, 5
        %v1447 = vsel %vm1441, %v1445, %v1446
        %v1448 = vrot.slane %v1203, 4
        %v1449 = vor.u32 %v1448, %v1446
        %v1450 = vrot.slane %v1449, 4
        %v1451 = vrot.slane %v1211, 4
        %v1452 = vrot.slane %v1214, 5
        %v1453 = vor.u32 %v1451, %v1452
        %v1454 = vrot.slane %v1453, 4
        %v1455 = vrot.slane %v1222, 5
        %v1456 = vsel %vm1441, %v1454, %v1455
        %v1457 = vrot.slane %v1219, 4
        %v1458 = vor.u32 %v1457, %v1455
        %v1459 = vrot.slane %v1458, 4
        %v1460 = vrot.slane %v1227, 4
        %v1461 = vrot.slane %v1230, 5
        %v1462 = vor.u32 %v1460, %v1461
        %v1463 = vrot.slane %v1462, 4
        %v1464 = vrot.slane %v1238, 5
        %v1465 = vsel %vm1441, %v1463, %v1464
        %v1466 = vrot.slane %v1235, 4
        %v1467 = vor.u32 %v1466, %v1464
        %v1468 = vrot.slane %v1467, 4
        %v1469 = vrot.slane %v1243, 4
        %v1470 = vrot.slane %v1246, 5
        %v1471 = vor.u32 %v1469, %v1470
        %v1472 = vrot.slane %v1471, 4
        %v1473 = vrot.slane %v1254, 5
        %v1474 = vsel %vm1441, %v1472, %v1473
        %v1475 = vrot.slane %v1251, 4
        %v1476 = vor.u32 %v1475, %v1473
        %v1477 = vrot.slane %v1476, 4
        %v1478 = vrot.slane %v1259, 4
        %v1479 = vrot.slane %v1262, 5
        %v1480 = vor.u32 %v1478, %v1479
        %v1481 = vrot.slane %v1480, 4
        %v1482 = vrot.slane %v1270, 5
        %v1483 = vsel %vm1441, %v1481, %v1482
        %v1484 = vrot.slane %v1267, 4
        %v1485 = vor.u32 %v1484, %v1482
        %v1486 = vrot.slane %v1485, 4
        %v1487 = vrot.slane %v1275, 4
        %v1488 = vrot.slane %v1278, 5
        %v1489 = vor.u32 %v1487, %v1488
        %v1490 = vrot.slane %v1489, 4
        %v1491 = vrot.slane %v1286, 5
        %v1492 = vsel %vm1441, %v1490, %v1491
        %v1493 = vrot.slane %v1283, 4
        %v1494 = vor.u32 %v1493, %v1491
        %v1495 = vrot.slane %v1494, 4
        %v1496 = vrot.slane %v1291, 4
        %v1497 = vrot.slane %v1294, 5
        %v1498 = vor.u32 %v1496, %v1497
        %v1499 = vrot.slane %v1498, 4
        %v1500 = vrot.slane %v1302, 5
        %v1501 = vsel %vm1441, %v1499, %v1500
        %v1502 = vrot.slane %v1299, 4
        %v1503 = vor.u32 %v1502, %v1500
        %v1504 = vrot.slane %v1503, 4
        %v1505 = vrot.slane %v1307, 4
        %v1506 = vrot.slane %v1310, 5
        %v1507 = vor.u32 %v1505, %v1506
        %v1508 = vrot.slane %v1507, 4
        %v1509 = vrot.slane %v1318, 5
        %v1510 = vsel %vm1441, %v1508, %v1509
        %v1511 = vrot.slane %v1315, 4
        %v1512 = vor.u32 %v1511, %v1509
        %v1513 = vrot.slane %v1512, 4
        %1514 = vrot.lane.b32.xlu0 %v1447, 12
        %v1515 = vpop.permute.xlu0 %1514
        %1516 = vrot.lane.b32.xlu0 %v1450, 12
        %v1517 = vpop.permute.xlu0 %1516
        %1518 = vrot.lane.b32.xlu0 %v1456, 12
        %v1519 = vpop.permute.xlu0 %1518
        %1520 = vrot.lane.b32.xlu0 %v1459, 12
        %v1521 = vpop.permute.xlu0 %1520
        %1522 = vrot.lane.b32.xlu0 %v1465, 12
        %v1523 = vpop.permute.xlu0 %1522
        %1524 = vrot.lane.b32.xlu0 %v1468, 12
        %v1525 = vpop.permute.xlu0 %1524
        %1526 = vrot.lane.b32.xlu0 %v1474, 12
        %v1527 = vpop.permute.xlu0 %1526
        %1528 = vrot.lane.b32.xlu0 %v1477, 12
        %v1529 = vpop.permute.xlu0 %1528
        %1530 = vrot.lane.b32.xlu0 %v1483, 12
        %v1531 = vpop.permute.xlu0 %1530
        %1532 = vrot.lane.b32.xlu0 %v1486, 12
        %v1533 = vpop.permute.xlu0 %1532
        %1534 = vrot.lane.b32.xlu0 %v1492, 12
        %v1535 = vpop.permute.xlu0 %1534
        %1536 = vrot.lane.b32.xlu0 %v1495, 12
        %v1537 = vpop.permute.xlu0 %1536
        %1538 = vrot.lane.b32.xlu0 %v1501, 12
        %v1539 = vpop.permute.xlu0 %1538
        %1540 = vrot.lane.b32.xlu0 %v1504, 12
        %v1541 = vpop.permute.xlu0 %1540
        %1542 = vrot.lane.b32.xlu0 %v1510, 12
        %v1543 = vpop.permute.xlu0 %1542
        %1544 = vrot.lane.b32.xlu0 %v1513, 12
        %v1545 = vpop.permute.xlu0 %1544
        %vm1562 = vcmask 142432
        %1563 = vst.msk [vmem:[#allocation2] sm:$0xf] %vm1562, %v1515
        %vm1564 = vcmask 142432
        %vm1565 = vmand %vm1564, %vm1439
        %v1566 = vld [vmem:[#allocation2 + $0x4] sm:$0xf]
        %v1567 = vsel %vm1565, %v1517, %v1566
        %1568 = vst [vmem:[#allocation2 + $0x4] sm:$0xf] %v1567
        %1569 = vst.msk [vmem:[#allocation2 + $0x8] sm:$0xf] %vm1562, %v1519
        %v1570 = vld [vmem:[#allocation2 + $0xc] sm:$0xf]
        %v1571 = vsel %vm1565, %v1521, %v1570
        %1572 = vst [vmem:[#allocation2 + $0xc] sm:$0xf] %v1571
        %1573 = vst.msk [vmem:[#allocation2 + $0x10] sm:$0xf] %vm1562, %v1523
        %v1574 = vld [vmem:[#allocation2 + $0x14] sm:$0xf]
        %v1575 = vsel %vm1565, %v1525, %v1574
        %1576 = vst [vmem:[#allocation2 + $0x14] sm:$0xf] %v1575
        %1577 = vst.msk [vmem:[#allocation2 + $0x18] sm:$0xf] %vm1562, %v1527
        %v1578 = vld [vmem:[#allocation2 + $0x1c] sm:$0xf]
        %v1579 = vsel %vm1565, %v1529, %v1578
        %1580 = vst [vmem:[#allocation2 + $0x1c] sm:$0xf] %v1579
        %1581 = vst.msk [vmem:[#allocation2 + $0x20] sm:$0xf] %vm1562, %v1531
        %v1582 = vld [vmem:[#allocation2 + $0x24] sm:$0xf]
        %v1583 = vsel %vm1565, %v1533, %v1582
        %1584 = vst [vmem:[#allocation2 + $0x24] sm:$0xf] %v1583
        %1585 = vst.msk [vmem:[#allocation2 + $0x28] sm:$0xf] %vm1562, %v1535
        %v1586 = vld [vmem:[#allocation2 + $0x2c] sm:$0xf]
        %v1587 = vsel %vm1565, %v1537, %v1586
        %1588 = vst [vmem:[#allocation2 + $0x2c] sm:$0xf] %v1587
        %1589 = vst.msk [vmem:[#allocation2 + $0x30] sm:$0xf] %vm1562, %v1539
        %v1590 = vld [vmem:[#allocation2 + $0x34] sm:$0xf]
        %v1591 = vsel %vm1565, %v1541, %v1590
        %1592 = vst [vmem:[#allocation2 + $0x34] sm:$0xf] %v1591
        %1593 = vst.msk [vmem:[#allocation2 + $0x38] sm:$0xf] %vm1562, %v1543
        %v1594 = vld [vmem:[#allocation2 + $0x3c] sm:$0xf]
        %v1595 = vsel %vm1565, %v1545, %v1594
        %1596 = vst [vmem:[#allocation2 + $0x3c] sm:$0xf] %v1595
        %vm1597 = vcmask 142435
        %vm1598 = vsmask.f32 7950
        %vm1599 = vmand %vm1597, %vm1598
        %v1600 = vld [vmem:[#allocation2 + $0x4] sm:$0x8]
        %v1601 = vsel %vm1599, 0, %v1600
        %1602 = vst [vmem:[#allocation2 + $0x4] sm:$0x8] %v1601
        %v1603 = vld [vmem:[#allocation2 + $0xc] sm:$0x8]
        %v1604 = vsel %vm1599, 0, %v1603
        %1605 = vst [vmem:[#allocation2 + $0xc] sm:$0x8] %v1604
        %v1606 = vld [vmem:[#allocation2 + $0x14] sm:$0x8]
        %v1607 = vsel %vm1599, 0, %v1606
        %1608 = vst [vmem:[#allocation2 + $0x14] sm:$0x8] %v1607
        %v1609 = vld [vmem:[#allocation2 + $0x1c] sm:$0x8]
        %v1610 = vsel %vm1599, 0, %v1609
        %1611 = vst [vmem:[#allocation2 + $0x1c] sm:$0x8] %v1610
        %v1612 = vld [vmem:[#allocation2 + $0x24] sm:$0x8]
        %v1613 = vsel %vm1599, 0, %v1612
        %1614 = vst [vmem:[#allocation2 + $0x24] sm:$0x8] %v1613
        %v1615 = vld [vmem:[#allocation2 + $0x2c] sm:$0x8]
        %v1616 = vsel %vm1599, 0, %v1615
        %1617 = vst [vmem:[#allocation2 + $0x2c] sm:$0x8] %v1616
        %v1618 = vld [vmem:[#allocation2 + $0x34] sm:$0x8]
        %v1619 = vsel %vm1599, 0, %v1618
        %1620 = vst [vmem:[#allocation2 + $0x34] sm:$0x8] %v1619
        %v1621 = vld [vmem:[#allocation2 + $0x3c] sm:$0x8]
        %v1622 = vsel %vm1599, 0, %v1621
        %1623 = vst [vmem:[#allocation2 + $0x3c] sm:$0x8] %v1622
        %vm1624 = vcmask 188560
        %vm1625 = vmand %vm1624, %vm1126
        %v1626 = vld [vmem:[#allocation2] sm:$0x1]
        %v1627 = vsel %vm1625, 0, %v1626
        %1628 = vst [vmem:[#allocation2] sm:$0x1] %v1627
        %v1629 = vld [vmem:[#allocation2 + $0x8] sm:$0x1]
        %v1630 = vsel %vm1625, 0, %v1629
        %1631 = vst [vmem:[#allocation2 + $0x8] sm:$0x1] %v1630
        %v1632 = vld [vmem:[#allocation2 + $0x10] sm:$0x1]
        %v1633 = vsel %vm1625, 0, %v1632
        %1634 = vst [vmem:[#allocation2 + $0x10] sm:$0x1] %v1633
        %v1635 = vld [vmem:[#allocation2 + $0x18] sm:$0x1]
        %v1636 = vsel %vm1625, 0, %v1635
        %1637 = vst [vmem:[#allocation2 + $0x18] sm:$0x1] %v1636
        %v1638 = vld [vmem:[#allocation2 + $0x20] sm:$0x1]
        %v1639 = vsel %vm1625, 0, %v1638
        %1640 = vst [vmem:[#allocation2 + $0x20] sm:$0x1] %v1639
        %v1641 = vld [vmem:[#allocation2 + $0x28] sm:$0x1]
        %v1642 = vsel %vm1625, 0, %v1641
        %1643 = vst [vmem:[#allocation2 + $0x28] sm:$0x1] %v1642
        %v1644 = vld [vmem:[#allocation2 + $0x30] sm:$0x1]
        %v1645 = vsel %vm1625, 0, %v1644
        %1646 = vst [vmem:[#allocation2 + $0x30] sm:$0x1] %v1645
        %v1647 = vld [vmem:[#allocation2 + $0x38] sm:$0x1]
        %v1648 = vsel %vm1625, 0, %v1647
        %1649 = vst [vmem:[#allocation2 + $0x38] sm:$0x1] %v1648
        %v1651 = vunpack.c.l.b16 %v973
        %v1652 = vunpack.c.h.b16 %v973
        %v1653 = vpack.c.b16 %v1651, %v1651
        %v1654 = vpack.c.b16 %v1652, %v1652
        %v1656 = vshrl.u32 %v1653, 16
        %v1658 = vrot.slane %v1656, 7
        %v1659 = vshll.u32 %v1653, 16
        %v1661 = vor.u32 %v1658, %v1659
        %v1662 = vrot.slane %v1658, 4
        %v1664 = vshrl.u32 %v1654, 16
        %v1666 = vrot.slane %v1664, 7
        %v1667 = vshll.u32 %v1654, 16
        %v1669 = vor.u32 %v1666, %v1667
        %v1670 = vsel %vm1193, %v1662, %v1669
        %1671 = vrot.lane.b32.xlu0 %v1216, 18
        %v1672 = vpop.permute.xlu0 %1671
        %1673 = vrot.lane.b32.xlu0 %v1225, 18
        %v1674 = vpop.permute.xlu0 %1673
        %1675 = vrot.lane.b32.xlu0 %v1232, 18
        %v1676 = vpop.permute.xlu0 %1675
        %1677 = vrot.lane.b32.xlu0 %v1241, 18
        %v1678 = vpop.permute.xlu0 %1677
        %1679 = vrot.lane.b32.xlu0 %v1248, 18
        %v1680 = vpop.permute.xlu0 %1679
        %1681 = vrot.lane.b32.xlu0 %v1257, 18
        %v1682 = vpop.permute.xlu0 %1681
        %1683 = vrot.lane.b32.xlu0 %v1264, 18
        %v1684 = vpop.permute.xlu0 %1683
        %1685 = vrot.lane.b32.xlu0 %v1273, 18
        %v1686 = vpop.permute.xlu0 %1685
        %1687 = vrot.lane.b32.xlu0 %v1280, 18
        %v1688 = vpop.permute.xlu0 %1687
        %1689 = vrot.lane.b32.xlu0 %v1289, 18
        %v1690 = vpop.permute.xlu0 %1689
        %1691 = vrot.lane.b32.xlu0 %v1296, 18
        %v1692 = vpop.permute.xlu0 %1691
        %1693 = vrot.lane.b32.xlu0 %v1305, 18
        %v1694 = vpop.permute.xlu0 %1693
        %1695 = vrot.lane.b32.xlu0 %v1312, 18
        %v1696 = vpop.permute.xlu0 %1695
        %1697 = vrot.lane.b32.xlu0 %v1321, 18
        %v1698 = vpop.permute.xlu0 %1697
        %1699 = vrot.lane.b32.xlu0 %v1661, 18
        %v1700 = vpop.permute.xlu0 %1699
        %1701 = vrot.lane.b32.xlu0 %v1670, 18
        %v1702 = vpop.permute.xlu0 %1701
        %vm1719 = vcmask 191632
        %vm1720 = vmand %vm1719, %vm1339
        %v1721 = vld [vmem:[#allocation2] sm:$0xf]
        %v1722 = vsel %vm1720, %v1672, %v1721
        %1723 = vst [vmem:[#allocation2] sm:$0xf] %v1722
        %vm1724 = vcmask 191632
        %1725 = vst.msk [vmem:[#allocation2 + $0x4] sm:$0xf] %vm1724, %v1674
        %v1726 = vld [vmem:[#allocation2 + $0x8] sm:$0xf]
        %v1727 = vsel %vm1720, %v1676, %v1726
        %1728 = vst [vmem:[#allocation2 + $0x8] sm:$0xf] %v1727
        %1729 = vst.msk [vmem:[#allocation2 + $0xc] sm:$0xf] %vm1724, %v1678
        %v1730 = vld [vmem:[#allocation2 + $0x10] sm:$0xf]
        %v1731 = vsel %vm1720, %v1680, %v1730
        %1732 = vst [vmem:[#allocation2 + $0x10] sm:$0xf] %v1731
        %1733 = vst.msk [vmem:[#allocation2 + $0x14] sm:$0xf] %vm1724, %v1682
        %v1734 = vld [vmem:[#allocation2 + $0x18] sm:$0xf]
        %v1735 = vsel %vm1720, %v1684, %v1734
        %1736 = vst [vmem:[#allocation2 + $0x18] sm:$0xf] %v1735
        %1737 = vst.msk [vmem:[#allocation2 + $0x1c] sm:$0xf] %vm1724, %v1686
        %v1738 = vld [vmem:[#allocation2 + $0x20] sm:$0xf]
        %v1739 = vsel %vm1720, %v1688, %v1738
        %1740 = vst [vmem:[#allocation2 + $0x20] sm:$0xf] %v1739
        %1741 = vst.msk [vmem:[#allocation2 + $0x24] sm:$0xf] %vm1724, %v1690
        %v1742 = vld [vmem:[#allocation2 + $0x28] sm:$0xf]
        %v1743 = vsel %vm1720, %v1692, %v1742
        %1744 = vst [vmem:[#allocation2 + $0x28] sm:$0xf] %v1743
        %1745 = vst.msk [vmem:[#allocation2 + $0x2c] sm:$0xf] %vm1724, %v1694
        %v1746 = vld [vmem:[#allocation2 + $0x30] sm:$0xf]
        %v1747 = vsel %vm1720, %v1696, %v1746
        %1748 = vst [vmem:[#allocation2 + $0x30] sm:$0xf] %v1747
        %1749 = vst.msk [vmem:[#allocation2 + $0x34] sm:$0xf] %vm1724, %v1698
        %v1750 = vld [vmem:[#allocation2 + $0x38] sm:$0xf]
        %v1751 = vsel %vm1720, %v1700, %v1750
        %1752 = vst [vmem:[#allocation2 + $0x38] sm:$0xf] %v1751
        %1753 = vst.msk [vmem:[#allocation2 + $0x3c] sm:$0xf] %vm1724, %v1702
        %1754 = vrot.lane.b32.xlu0 %v1178, 24
        %v1755 = vpop.permute.xlu0 %1754
        %1756 = vrot.lane.b32.xlu0 %v1179, 24
        %v1757 = vpop.permute.xlu0 %1756
        %1758 = vrot.lane.b32.xlu0 %v1180, 24
        %v1759 = vpop.permute.xlu0 %1758
        %1760 = vrot.lane.b32.xlu0 %v1181, 24
        %v1761 = vpop.permute.xlu0 %1760
        %1762 = vrot.lane.b32.xlu0 %v1182, 24
        %v1763 = vpop.permute.xlu0 %1762
        %1764 = vrot.lane.b32.xlu0 %v1183, 24
        %v1765 = vpop.permute.xlu0 %1764
        %1766 = vrot.lane.b32.xlu0 %v1184, 24
        %v1767 = vpop.permute.xlu0 %1766
        %1768 = vrot.lane.b32.xlu0 %v1185, 24
        %v1769 = vpop.permute.xlu0 %1768
        %1770 = vrot.lane.b32.xlu0 %v1186, 24
        %v1771 = vpop.permute.xlu0 %1770
        %1772 = vrot.lane.b32.xlu0 %v1187, 24
        %v1773 = vpop.permute.xlu0 %1772
        %1774 = vrot.lane.b32.xlu0 %v1188, 24
        %v1775 = vpop.permute.xlu0 %1774
        %1776 = vrot.lane.b32.xlu0 %v1189, 24
        %v1777 = vpop.permute.xlu0 %1776
        %1778 = vrot.lane.b32.xlu0 %v1190, 24
        %v1779 = vpop.permute.xlu0 %1778
        %1780 = vrot.lane.b32.xlu0 %v1191, 24
        %v1781 = vpop.permute.xlu0 %1780
        %1782 = vrot.lane.b32.xlu0 %v1653, 24
        %v1783 = vpop.permute.xlu0 %1782
        %1784 = vrot.lane.b32.xlu0 %v1654, 24
        %v1785 = vpop.permute.xlu0 %1784
        %vm1802 = vcmask 240832
        %1803 = vst.msk [vmem:[#allocation2] sm:$0xf] %vm1802, %v1755
        %1804 = vst.msk [vmem:[#allocation2 + $0x4] sm:$0xf] %vm1802, %v1757
        %1805 = vst.msk [vmem:[#allocation2 + $0x8] sm:$0xf] %vm1802, %v1759
        %1806 = vst.msk [vmem:[#allocation2 + $0xc] sm:$0xf] %vm1802, %v1761
        %1807 = vst.msk [vmem:[#allocation2 + $0x10] sm:$0xf] %vm1802, %v1763
        %1808 = vst.msk [vmem:[#allocation2 + $0x14] sm:$0xf] %vm1802, %v1765
        %1809 = vst.msk [vmem:[#allocation2 + $0x18] sm:$0xf] %vm1802, %v1767
        %1810 = vst.msk [vmem:[#allocation2 + $0x1c] sm:$0xf] %vm1802, %v1769
        %1811 = vst.msk [vmem:[#allocation2 + $0x20] sm:$0xf] %vm1802, %v1771
        %1812 = vst.msk [vmem:[#allocation2 + $0x24] sm:$0xf] %vm1802, %v1773
        %1813 = vst.msk [vmem:[#allocation2 + $0x28] sm:$0xf] %vm1802, %v1775
        %1814 = vst.msk [vmem:[#allocation2 + $0x2c] sm:$0xf] %vm1802, %v1777
        %1815 = vst.msk [vmem:[#allocation2 + $0x30] sm:$0xf] %vm1802, %v1779
        %1816 = vst.msk [vmem:[#allocation2 + $0x34] sm:$0xf] %vm1802, %v1781
        %1817 = vst.msk [vmem:[#allocation2 + $0x38] sm:$0xf] %vm1802, %v1783
        %1818 = vst.msk [vmem:[#allocation2 + $0x3c] sm:$0xf] %vm1802, %v1785
        %v1819 = vrot.slane %v1656, 4
        %v1820 = vrot.slane %v1659, 5
        %v1821 = vor.u32 %v1819, %v1820
        %v1822 = vrot.slane %v1821, 4
        %v1823 = vrot.slane %v1667, 5
        %v1824 = vsel %vm1441, %v1822, %v1823
        %v1825 = vrot.slane %v1664, 4
        %v1826 = vor.u32 %v1825, %v1823
        %v1827 = vrot.slane %v1826, 4
        %1828 = vrot.lane.b32.xlu0 %v1456, 30
        %v1829 = vpop.permute.xlu0 %1828
        %1830 = vrot.lane.b32.xlu0 %v1459, 30
        %v1831 = vpop.permute.xlu0 %1830
        %1832 = vrot.lane.b32.xlu0 %v1465, 30
        %v1833 = vpop.permute.xlu0 %1832
        %1834 = vrot.lane.b32.xlu0 %v1468, 30
        %v1835 = vpop.permute.xlu0 %1834
        %1836 = vrot.lane.b32.xlu0 %v1474, 30
        %v1837 = vpop.permute.xlu0 %1836
        %1838 = vrot.lane.b32.xlu0 %v1477, 30
        %v1839 = vpop.permute.xlu0 %1838
        %1840 = vrot.lane.b32.xlu0 %v1483, 30
        %v1841 = vpop.permute.xlu0 %1840
        %1842 = vrot.lane.b32.xlu0 %v1486, 30
        %v1843 = vpop.permute.xlu0 %1842
        %1844 = vrot.lane.b32.xlu0 %v1492, 30
        %v1845 = vpop.permute.xlu0 %1844
        %1846 = vrot.lane.b32.xlu0 %v1495, 30
        %v1847 = vpop.permute.xlu0 %1846
        %1848 = vrot.lane.b32.xlu0 %v1501, 30
        %v1849 = vpop.permute.xlu0 %1848
        %1850 = vrot.lane.b32.xlu0 %v1504, 30
        %v1851 = vpop.permute.xlu0 %1850
        %1852 = vrot.lane.b32.xlu0 %v1510, 30
        %v1853 = vpop.permute.xlu0 %1852
        %1854 = vrot.lane.b32.xlu0 %v1513, 30
        %v1855 = vpop.permute.xlu0 %1854
        %1856 = vrot.lane.b32.xlu0 %v1824, 30
        %v1857 = vpop.permute.xlu0 %1856
        %1858 = vrot.lane.b32.xlu0 %v1827, 30
        %v1859 = vpop.permute.xlu0 %1858
        %vm1876 = vcmask 290032
        %1877 = vst.msk [vmem:[#allocation2] sm:$0xf] %vm1876, %v1829
        %vm1878 = vcmask 290032
        %vm1879 = vmand %vm1878, %vm1439
        %v1880 = vld [vmem:[#allocation2 + $0x4] sm:$0xf]
        %v1881 = vsel %vm1879, %v1831, %v1880
        %1882 = vst [vmem:[#allocation2 + $0x4] sm:$0xf] %v1881
        %1883 = vst.msk [vmem:[#allocation2 + $0x8] sm:$0xf] %vm1876, %v1833
        %v1884 = vld [vmem:[#allocation2 + $0xc] sm:$0xf]
        %v1885 = vsel %vm1879, %v1835, %v1884
        %1886 = vst [vmem:[#allocation2 + $0xc] sm:$0xf] %v1885
        %1887 = vst.msk [vmem:[#allocation2 + $0x10] sm:$0xf] %vm1876, %v1837
        %v1888 = vld [vmem:[#allocation2 + $0x14] sm:$0xf]
        %v1889 = vsel %vm1879, %v1839, %v1888
        %1890 = vst [vmem:[#allocation2 + $0x14] sm:$0xf] %v1889
        %1891 = vst.msk [vmem:[#allocation2 + $0x18] sm:$0xf] %vm1876, %v1841
        %v1892 = vld [vmem:[#allocation2 + $0x1c] sm:$0xf]
        %v1893 = vsel %vm1879, %v1843, %v1892
        %1894 = vst [vmem:[#allocation2 + $0x1c] sm:$0xf] %v1893
        %1895 = vst.msk [vmem:[#allocation2 + $0x20] sm:$0xf] %vm1876, %v1845
        %v1896 = vld [vmem:[#allocation2 + $0x24] sm:$0xf]
        %v1897 = vsel %vm1879, %v1847, %v1896
        %1898 = vst [vmem:[#allocation2 + $0x24] sm:$0xf] %v1897
        %1899 = vst.msk [vmem:[#allocation2 + $0x28] sm:$0xf] %vm1876, %v1849
        %v1900 = vld [vmem:[#allocation2 + $0x2c] sm:$0xf]
        %v1901 = vsel %vm1879, %v1851, %v1900
        %1902 = vst [vmem:[#allocation2 + $0x2c] sm:$0xf] %v1901
        %1903 = vst.msk [vmem:[#allocation2 + $0x30] sm:$0xf] %vm1876, %v1853
        %v1904 = vld [vmem:[#allocation2 + $0x34] sm:$0xf]
        %v1905 = vsel %vm1879, %v1855, %v1904
        %1906 = vst [vmem:[#allocation2 + $0x34] sm:$0xf] %v1905
        %1907 = vst.msk [vmem:[#allocation2 + $0x38] sm:$0xf] %vm1876, %v1857
        %v1908 = vld [vmem:[#allocation2 + $0x3c] sm:$0xf]
        %v1909 = vsel %vm1879, %v1859, %v1908
        %1910 = vst [vmem:[#allocation2 + $0x3c] sm:$0xf] %v1909
        %vm1911 = vcmask 290035
        %vm1912 = vmand %vm1911, %vm1598
        %v1913 = vld [vmem:[#allocation2 + $0x4] sm:$0x8]
        %v1914 = vsel %vm1912, 0, %v1913
        %1915 = vst [vmem:[#allocation2 + $0x4] sm:$0x8] %v1914
        %v1916 = vld [vmem:[#allocation2 + $0xc] sm:$0x8]
        %v1917 = vsel %vm1912, 0, %v1916
        %1918 = vst [vmem:[#allocation2 + $0xc] sm:$0x8] %v1917
        %v1919 = vld [vmem:[#allocation2 + $0x14] sm:$0x8]
        %v1920 = vsel %vm1912, 0, %v1919
        %1921 = vst [vmem:[#allocation2 + $0x14] sm:$0x8] %v1920
        %v1922 = vld [vmem:[#allocation2 + $0x1c] sm:$0x8]
        %v1923 = vsel %vm1912, 0, %v1922
        %1924 = vst [vmem:[#allocation2 + $0x1c] sm:$0x8] %v1923
        %v1925 = vld [vmem:[#allocation2 + $0x24] sm:$0x8]
        %v1926 = vsel %vm1912, 0, %v1925
        %1927 = vst [vmem:[#allocation2 + $0x24] sm:$0x8] %v1926
        %v1928 = vld [vmem:[#allocation2 + $0x2c] sm:$0x8]
        %v1929 = vsel %vm1912, 0, %v1928
        %1930 = vst [vmem:[#allocation2 + $0x2c] sm:$0x8] %v1929
        %v1931 = vld [vmem:[#allocation2 + $0x34] sm:$0x8]
        %v1932 = vsel %vm1912, 0, %v1931
        %1933 = vst [vmem:[#allocation2 + $0x34] sm:$0x8] %v1932
        %v1934 = vld [vmem:[#allocation2 + $0x3c] sm:$0x8]
        %v1935 = vsel %vm1912, 0, %v1934
        %1936 = vst [vmem:[#allocation2 + $0x3c] sm:$0x8] %v1935
        %vm1937 = vcmask 336160
        %vm1938 = vmand %vm1937, %vm1126
        %v1939 = vld [vmem:[#allocation2] sm:$0x1]
        %v1940 = vsel %vm1938, 0, %v1939
        %1941 = vst [vmem:[#allocation2] sm:$0x1] %v1940
        %v1942 = vld [vmem:[#allocation2 + $0x8] sm:$0x1]
        %v1943 = vsel %vm1938, 0, %v1942
        %1944 = vst [vmem:[#allocation2 + $0x8] sm:$0x1] %v1943
        %v1945 = vld [vmem:[#allocation2 + $0x10] sm:$0x1]
        %v1946 = vsel %vm1938, 0, %v1945
        %1947 = vst [vmem:[#allocation2 + $0x10] sm:$0x1] %v1946
        %v1948 = vld [vmem:[#allocation2 + $0x18] sm:$0x1]
        %v1949 = vsel %vm1938, 0, %v1948
        %1950 = vst [vmem:[#allocation2 + $0x18] sm:$0x1] %v1949
        %v1951 = vld [vmem:[#allocation2 + $0x20] sm:$0x1]
        %v1952 = vsel %vm1938, 0, %v1951
        %1953 = vst [vmem:[#allocation2 + $0x20] sm:$0x1] %v1952
        %v1954 = vld [vmem:[#allocation2 + $0x28] sm:$0x1]
        %v1955 = vsel %vm1938, 0, %v1954
        %1956 = vst [vmem:[#allocation2 + $0x28] sm:$0x1] %v1955
        %v1957 = vld [vmem:[#allocation2 + $0x30] sm:$0x1]
        %v1958 = vsel %vm1938, 0, %v1957
        %1959 = vst [vmem:[#allocation2 + $0x30] sm:$0x1] %v1958
        %v1960 = vld [vmem:[#allocation2 + $0x38] sm:$0x1]
        %v1961 = vsel %vm1938, 0, %v1960
        %1962 = vst [vmem:[#allocation2 + $0x38] sm:$0x1] %v1961
        %v1964 = vunpack.c.l.b16 %v974
        %v1965 = vunpack.c.h.b16 %v974
        %v1966 = vpack.c.b16 %v1964, %v1964
        %v1967 = vpack.c.b16 %v1965, %v1965
        %v1969 = vshrl.u32 %v1966, 16
        %v1971 = vrot.slane %v1969, 7
        %v1972 = vshll.u32 %v1966, 16
        %v1974 = vor.u32 %v1971, %v1972
        %v1975 = vrot.slane %v1971, 4
        %v1977 = vshrl.u32 %v1967, 16
        %v1979 = vrot.slane %v1977, 7
        %v1980 = vshll.u32 %v1967, 16
        %v1982 = vor.u32 %v1979, %v1980
        %v1983 = vsel %vm1193, %v1975, %v1982
        %1984 = vrot.lane.b32.xlu0 %v1232, 36
        %v1985 = vpop.permute.xlu0 %1984
        %1986 = vrot.lane.b32.xlu0 %v1241, 36
        %v1987 = vpop.permute.xlu0 %1986
        %1988 = vrot.lane.b32.xlu0 %v1248, 36
        %v1989 = vpop.permute.xlu0 %1988
        %1990 = vrot.lane.b32.xlu0 %v1257, 36
        %v1991 = vpop.permute.xlu0 %1990
        %1992 = vrot.lane.b32.xlu0 %v1264, 36
        %v1993 = vpop.permute.xlu0 %1992
        %1994 = vrot.lane.b32.xlu0 %v1273, 36
        %v1995 = vpop.permute.xlu0 %1994
        %1996 = vrot.lane.b32.xlu0 %v1280, 36
        %v1997 = vpop.permute.xlu0 %1996
        %1998 = vrot.lane.b32.xlu0 %v1289, 36
        %v1999 = vpop.permute.xlu0 %1998
        %2000 = vrot.lane.b32.xlu0 %v1296, 36
        %v2001 = vpop.permute.xlu0 %2000
        %2002 = vrot.lane.b32.xlu0 %v1305, 36
        %v2003 = vpop.permute.xlu0 %2002
        %2004 = vrot.lane.b32.xlu0 %v1312, 36
        %v2005 = vpop.permute.xlu0 %2004
        %2006 = vrot.lane.b32.xlu0 %v1321, 36
        %v2007 = vpop.permute.xlu0 %2006
        %2008 = vrot.lane.b32.xlu0 %v1661, 36
        %v2009 = vpop.permute.xlu0 %2008
        %2010 = vrot.lane.b32.xlu0 %v1670, 36
        %v2011 = vpop.permute.xlu0 %2010
        %2012 = vrot.lane.b32.xlu0 %v1974, 36
        %v2013 = vpop.permute.xlu0 %2012
        %2014 = vrot.lane.b32.xlu0 %v1983, 36
        %v2015 = vpop.permute.xlu0 %2014
        %vm2032 = vcmask 339232
        %vm2033 = vmand %vm2032, %vm1339
        %v2034 = vld [vmem:[#allocation2] sm:$0xf]
        %v2035 = vsel %vm2033, %v1985, %v2034
        %2036 = vst [vmem:[#allocation2] sm:$0xf] %v2035
        %vm2037 = vcmask 339232
        %2038 = vst.msk [vmem:[#allocation2 + $0x4] sm:$0xf] %vm2037, %v1987
        %v2039 = vld [vmem:[#allocation2 + $0x8] sm:$0xf]
        %v2040 = vsel %vm2033, %v1989, %v2039
        %2041 = vst [vmem:[#allocation2 + $0x8] sm:$0xf] %v2040
        %2042 = vst.msk [vmem:[#allocation2 + $0xc] sm:$0xf] %vm2037, %v1991
        %v2043 = vld [vmem:[#allocation2 + $0x10] sm:$0xf]
        %v2044 = vsel %vm2033, %v1993, %v2043
        %2045 = vst [vmem:[#allocation2 + $0x10] sm:$0xf] %v2044
        %2046 = vst.msk [vmem:[#allocation2 + $0x14] sm:$0xf] %vm2037, %v1995
        %v2047 = vld [vmem:[#allocation2 + $0x18] sm:$0xf]
        %v2048 = vsel %vm2033, %v1997, %v2047
        %2049 = vst [vmem:[#allocation2 + $0x18] sm:$0xf] %v2048
        %2050 = vst.msk [vmem:[#allocation2 + $0x1c] sm:$0xf] %vm2037, %v1999
        %v2051 = vld [vmem:[#allocation2 + $0x20] sm:$0xf]
        %v2052 = vsel %vm2033, %v2001, %v2051
        %2053 = vst [vmem:[#allocation2 + $0x20] sm:$0xf] %v2052
        %2054 = vst.msk [vmem:[#allocation2 + $0x24] sm:$0xf] %vm2037, %v2003
        %v2055 = vld [vmem:[#allocation2 + $0x28] sm:$0xf]
        %v2056 = vsel %vm2033, %v2005, %v2055
        %2057 = vst [vmem:[#allocation2 + $0x28] sm:$0xf] %v2056
        %2058 = vst.msk [vmem:[#allocation2 + $0x2c] sm:$0xf] %vm2037, %v2007
        %v2059 = vld [vmem:[#allocation2 + $0x30] sm:$0xf]
        %v2060 = vsel %vm2033, %v2009, %v2059
        %2061 = vst [vmem:[#allocation2 + $0x30] sm:$0xf] %v2060
        %2062 = vst.msk [vmem:[#allocation2 + $0x34] sm:$0xf] %vm2037, %v2011
        %v2063 = vld [vmem:[#allocation2 + $0x38] sm:$0xf]
        %v2064 = vsel %vm2033, %v2013, %v2063
        %2065 = vst [vmem:[#allocation2 + $0x38] sm:$0xf] %v2064
        %2066 = vst.msk [vmem:[#allocation2 + $0x3c] sm:$0xf] %vm2037, %v2015
        %2067 = vrot.lane.b32.xlu0 %v1180, 42
        %v2068 = vpop.permute.xlu0 %2067
        %2069 = vrot.lane.b32.xlu0 %v1181, 42
        %v2070 = vpop.permute.xlu0 %2069
        %2071 = vrot.lane.b32.xlu0 %v1182, 42
        %v2072 = vpop.permute.xlu0 %2071
        %2073 = vrot.lane.b32.xlu0 %v1183, 42
        %v2074 = vpop.permute.xlu0 %2073
        %2075 = vrot.lane.b32.xlu0 %v1184, 42
        %v2076 = vpop.permute.xlu0 %2075
        %2077 = vrot.lane.b32.xlu0 %v1185, 42
        %v2078 = vpop.permute.xlu0 %2077
        %2079 = vrot.lane.b32.xlu0 %v1186, 42
        %v2080 = vpop.permute.xlu0 %2079
        %2081 = vrot.lane.b32.xlu0 %v1187, 42
        %v2082 = vpop.permute.xlu0 %2081
        %2083 = vrot.lane.b32.xlu0 %v1188, 42
        %v2084 = vpop.permute.xlu0 %2083
        %2085 = vrot.lane.b32.xlu0 %v1189, 42
        %v2086 = vpop.permute.xlu0 %2085
        %2087 = vrot.lane.b32.xlu0 %v1190, 42
        %v2088 = vpop.permute.xlu0 %2087
        %2089 = vrot.lane.b32.xlu0 %v1191, 42
        %v2090 = vpop.permute.xlu0 %2089
        %2091 = vrot.lane.b32.xlu0 %v1653, 42
        %v2092 = vpop.permute.xlu0 %2091
        %2093 = vrot.lane.b32.xlu0 %v1654, 42
        %v2094 = vpop.permute.xlu0 %2093
        %2095 = vrot.lane.b32.xlu0 %v1966, 42
        %v2096 = vpop.permute.xlu0 %2095
        %2097 = vrot.lane.b32.xlu0 %v1967, 42
        %v2098 = vpop.permute.xlu0 %2097
        %vm2115 = vcmask 388432
        %2116 = vst.msk [vmem:[#allocation2] sm:$0xf] %vm2115, %v2068
        %2117 = vst.msk [vmem:[#allocation2 + $0x4] sm:$0xf] %vm2115, %v2070
        %2118 = vst.msk [vmem:[#allocation2 + $0x8] sm:$0xf] %vm2115, %v2072
        %2119 = vst.msk [vmem:[#allocation2 + $0xc] sm:$0xf] %vm2115, %v2074
        %2120 = vst.msk [vmem:[#allocation2 + $0x10] sm:$0xf] %vm2115, %v2076
        %2121 = vst.msk [vmem:[#allocation2 + $0x14] sm:$0xf] %vm2115, %v2078
        %2122 = vst.msk [vmem:[#allocation2 + $0x18] sm:$0xf] %vm2115, %v2080
        %2123 = vst.msk [vmem:[#allocation2 + $0x1c] sm:$0xf] %vm2115, %v2082
        %2124 = vst.msk [vmem:[#allocation2 + $0x20] sm:$0xf] %vm2115, %v2084
        %2125 = vst.msk [vmem:[#allocation2 + $0x24] sm:$0xf] %vm2115, %v2086
        %2126 = vst.msk [vmem:[#allocation2 + $0x28] sm:$0xf] %vm2115, %v2088
        %2127 = vst.msk [vmem:[#allocation2 + $0x2c] sm:$0xf] %vm2115, %v2090
        %2128 = vst.msk [vmem:[#allocation2 + $0x30] sm:$0xf] %vm2115, %v2092
        %2129 = vst.msk [vmem:[#allocation2 + $0x34] sm:$0xf] %vm2115, %v2094
        %2130 = vst.msk [vmem:[#allocation2 + $0x38] sm:$0xf] %vm2115, %v2096
        %2131 = vst.msk [vmem:[#allocation2 + $0x3c] sm:$0xf] %vm2115, %v2098
        %v2132 = vrot.slane %v1969, 4
        %v2133 = vrot.slane %v1972, 5
        %v2134 = vor.u32 %v2132, %v2133
        %v2135 = vrot.slane %v2134, 4
        %v2136 = vrot.slane %v1980, 5
        %v2137 = vsel %vm1441, %v2135, %v2136
        %v2138 = vrot.slane %v1977, 4
        %v2139 = vor.u32 %v2138, %v2136
        %v2140 = vrot.slane %v2139, 4
        %2141 = vrot.lane.b32.xlu0 %v1465, 48
        %v2142 = vpop.permute.xlu0 %2141
        %2143 = vrot.lane.b32.xlu0 %v1468, 48
        %v2144 = vpop.permute.xlu0 %2143
        %2145 = vrot.lane.b32.xlu0 %v1474, 48
        %v2146 = vpop.permute.xlu0 %2145
        %2147 = vrot.lane.b32.xlu0 %v1477, 48
        %v2148 = vpop.permute.xlu0 %2147
        %2149 = vrot.lane.b32.xlu0 %v1483, 48
        %v2150 = vpop.permute.xlu0 %2149
        %2151 = vrot.lane.b32.xlu0 %v1486, 48
        %v2152 = vpop.permute.xlu0 %2151
        %2153 = vrot.lane.b32.xlu0 %v1492, 48
        %v2154 = vpop.permute.xlu0 %2153
        %2155 = vrot.lane.b32.xlu0 %v1495, 48
        %v2156 = vpop.permute.xlu0 %2155
        %2157 = vrot.lane.b32.xlu0 %v1501, 48
        %v2158 = vpop.permute.xlu0 %2157
        %2159 = vrot.lane.b32.xlu0 %v1504, 48
        %v2160 = vpop.permute.xlu0 %2159
        %2161 = vrot.lane.b32.xlu0 %v1510, 48
        %v2162 = vpop.permute.xlu0 %2161
        %2163 = vrot.lane.b32.xlu0 %v1513, 48
        %v2164 = vpop.permute.xlu0 %2163
        %2165 = vrot.lane.b32.xlu0 %v1824, 48
        %v2166 = vpop.permute.xlu0 %2165
        %2167 = vrot.lane.b32.xlu0 %v1827, 48
        %v2168 = vpop.permute.xlu0 %2167
        %2169 = vrot.lane.b32.xlu0 %v2137, 48
        %v2170 = vpop.permute.xlu0 %2169
        %2171 = vrot.lane.b32.xlu0 %v2140, 48
        %v2172 = vpop.permute.xlu0 %2171
        %vm2189 = vcmask 437632
        %2190 = vst.msk [vmem:[#allocation2] sm:$0xf] %vm2189, %v2142
        %vm2191 = vcmask 437632
        %vm2192 = vmand %vm2191, %vm1439
        %v2193 = vld [vmem:[#allocation2 + $0x4] sm:$0xf]
        %v2194 = vsel %vm2192, %v2144, %v2193
        %2195 = vst [vmem:[#allocation2 + $0x4] sm:$0xf] %v2194
        %2196 = vst.msk [vmem:[#allocation2 + $0x8] sm:$0xf] %vm2189, %v2146
        %v2197 = vld [vmem:[#allocation2 + $0xc] sm:$0xf]
        %v2198 = vsel %vm2192, %v2148, %v2197
        %2199 = vst [vmem:[#allocation2 + $0xc] sm:$0xf] %v2198
        %2200 = vst.msk [vmem:[#allocation2 + $0x10] sm:$0xf] %vm2189, %v2150
        %v2201 = vld [vmem:[#allocation2 + $0x14] sm:$0xf]
        %v2202 = vsel %vm2192, %v2152, %v2201
        %2203 = vst [vmem:[#allocation2 + $0x14] sm:$0xf] %v2202
        %2204 = vst.msk [vmem:[#allocation2 + $0x18] sm:$0xf] %vm2189, %v2154
        %v2205 = vld [vmem:[#allocation2 + $0x1c] sm:$0xf]
        %v2206 = vsel %vm2192, %v2156, %v2205
        %2207 = vst [vmem:[#allocation2 + $0x1c] sm:$0xf] %v2206
        %2208 = vst.msk [vmem:[#allocation2 + $0x20] sm:$0xf] %vm2189, %v2158
        %v2209 = vld [vmem:[#allocation2 + $0x24] sm:$0xf]
        %v2210 = vsel %vm2192, %v2160, %v2209
        %2211 = vst [vmem:[#allocation2 + $0x24] sm:$0xf] %v2210
        %2212 = vst.msk [vmem:[#allocation2 + $0x28] sm:$0xf] %vm2189, %v2162
        %v2213 = vld [vmem:[#allocation2 + $0x2c] sm:$0xf]
        %v2214 = vsel %vm2192, %v2164, %v2213
        %2215 = vst [vmem:[#allocation2 + $0x2c] sm:$0xf] %v2214
        %2216 = vst.msk [vmem:[#allocation2 + $0x30] sm:$0xf] %vm2189, %v2166
        %v2217 = vld [vmem:[#allocation2 + $0x34] sm:$0xf]
        %v2218 = vsel %vm2192, %v2168, %v2217
        %2219 = vst [vmem:[#allocation2 + $0x34] sm:$0xf] %v2218
        %2220 = vst.msk [vmem:[#allocation2 + $0x38] sm:$0xf] %vm2189, %v2170
        %v2221 = vld [vmem:[#allocation2 + $0x3c] sm:$0xf]
        %v2222 = vsel %vm2192, %v2172, %v2221
        %2223 = vst [vmem:[#allocation2 + $0x3c] sm:$0xf] %v2222
        %vm2224 = vcmask 437635
        %vm2225 = vmand %vm2224, %vm1598
        %v2226 = vld [vmem:[#allocation2 + $0x4] sm:$0x8]
        %v2227 = vsel %vm2225, 0, %v2226
        %2228 = vst [vmem:[#allocation2 + $0x4] sm:$0x8] %v2227
        %v2229 = vld [vmem:[#allocation2 + $0xc] sm:$0x8]
        %v2230 = vsel %vm2225, 0, %v2229
        %2231 = vst [vmem:[#allocation2 + $0xc] sm:$0x8] %v2230
        %v2232 = vld [vmem:[#allocation2 + $0x14] sm:$0x8]
        %v2233 = vsel %vm2225, 0, %v2232
        %2234 = vst [vmem:[#allocation2 + $0x14] sm:$0x8] %v2233
        %v2235 = vld [vmem:[#allocation2 + $0x1c] sm:$0x8]
        %v2236 = vsel %vm2225, 0, %v2235
        %2237 = vst [vmem:[#allocation2 + $0x1c] sm:$0x8] %v2236
        %v2238 = vld [vmem:[#allocation2 + $0x24] sm:$0x8]
        %v2239 = vsel %vm2225, 0, %v2238
        %2240 = vst [vmem:[#allocation2 + $0x24] sm:$0x8] %v2239
        %v2241 = vld [vmem:[#allocation2 + $0x2c] sm:$0x8]
        %v2242 = vsel %vm2225, 0, %v2241
        %2243 = vst [vmem:[#allocation2 + $0x2c] sm:$0x8] %v2242
        %v2244 = vld [vmem:[#allocation2 + $0x34] sm:$0x8]
        %v2245 = vsel %vm2225, 0, %v2244
        %2246 = vst [vmem:[#allocation2 + $0x34] sm:$0x8] %v2245
        %v2247 = vld [vmem:[#allocation2 + $0x3c] sm:$0x8]
        %v2248 = vsel %vm2225, 0, %v2247
        %2249 = vst [vmem:[#allocation2 + $0x3c] sm:$0x8] %v2248
        %v2250 = vld [vmem:[#allocation2] sm:$0xf]
        %v2251 = vld [vmem:[#allocation2 + $0x4] sm:$0xf]
        %v2252 = vld [vmem:[#allocation2 + $0x8] sm:$0xf]
        %v2253 = vld [vmem:[#allocation2 + $0xc] sm:$0xf]
        %v2254 = vld [vmem:[#allocation2 + $0x10] sm:$0xf]
        %v2255 = vld [vmem:[#allocation2 + $0x14] sm:$0xf]
        %v2256 = vld [vmem:[#allocation2 + $0x18] sm:$0xf]
        %v2257 = vld [vmem:[#allocation2 + $0x1c] sm:$0xf]
        %v2258 = vld [vmem:[#allocation2 + $0x20] sm:$0xf]
        %v2259 = vld [vmem:[#allocation2 + $0x24] sm:$0xf]
        %v2260 = vld [vmem:[#allocation2 + $0x28] sm:$0xf]
        %v2261 = vld [vmem:[#allocation2 + $0x2c] sm:$0xf]
        %v2262 = vld [vmem:[#allocation2 + $0x30] sm:$0xf]
        %v2263 = vld [vmem:[#allocation2 + $0x34] sm:$0xf]
        %v2264 = vld [vmem:[#allocation2 + $0x38] sm:$0xf]
        %v2265 = vld [vmem:[#allocation2 + $0x3c] sm:$0xf]
        %v2266 = vld [vmem:[%s7] sm:$0xf]
        %v2267 = vld [vmem:[%s7 + $0x4] sm:$0xf]
        %v2268 = vld [vmem:[%s7 + $0x8] sm:$0xf]
        %v2269 = vld [vmem:[%s7 + $0xc] sm:$0xf]
        %v2270 = vld [vmem:[%s7 + $0x10] sm:$0xf]
        %v2271 = vld [vmem:[%s7 + $0x14] sm:$0xf]
        %v2272 = vld [vmem:[%s7 + $0x18] sm:$0x7]
        %v2273 = vld [vmem:[%s8] sm:$0x1]
        %v2275 = vlaneseq
        %v2276 = vshrl.u32 %v2275, 7
        %v2277 = vsub.s32 0, %v2276
        %v2278 = vrot.slane %v2273, %v2277
        %v2296 = vunpack.c.l.b16 %v2250
        %v2297 = vunpack.c.l.b16 %v2251
        %v2298 = vunpack.c.l.b16 %v2252
        %v2299 = vunpack.c.l.b16 %v2253
        %v2300 = vunpack.c.l.b16 %v2254
        %v2301 = vunpack.c.l.b16 %v2255
        %v2302 = vunpack.c.l.b16 %v2256
        %v2303 = vunpack.c.l.b16 %v2257
        %v2304 = vunpack.c.l.b16 %v2258
        %v2305 = vunpack.c.l.b16 %v2259
        %v2306 = vunpack.c.l.b16 %v2260
        %v2307 = vunpack.c.l.b16 %v2261
        %v2308 = vunpack.c.l.b16 %v2262
        %v2309 = vunpack.c.l.b16 %v2263
        %v2310 = vunpack.c.l.b16 %v2264
        %v2311 = vunpack.c.l.b16 %v2265
        %v2312 = vpack.c.b16 %v2297, %v2296
        %v2313 = vpack.c.b16 %v2299, %v2298
        %v2314 = vpack.c.b16 %v2301, %v2300
        %v2315 = vpack.c.b16 %v2303, %v2302
        %v2316 = vpack.c.b16 %v2305, %v2304
        %v2317 = vpack.c.b16 %v2307, %v2306
        %v2318 = vpack.c.b16 %v2309, %v2308
        %v2319 = vpack.c.b16 %v2311, %v2310
        %v2327 = vunpack.c.l.b16 %v2266
        %v2328 = vunpack.c.l.b16 %v2267
        %v2329 = vunpack.c.l.b16 %v2268
        %v2330 = vunpack.c.l.b16 %v2269
        %v2331 = vunpack.c.l.b16 %v2270
        %v2332 = vunpack.c.l.b16 %v2271
        %v2333 = vunpack.c.l.b16 %v2272
        %v2334 = vpack.c.b16 %v2328, %v2327
        %v2335 = vpack.c.b16 %v2330, %v2329
        %v2336 = vpack.c.b16 %v2332, %v2331
        %v2337 = vpack.c.b16 %v2333, %v2333
        %vm2341 = vcmask 441344
        %v2343 = vsel %vm2341, %v2312, 0
        %v2346 = vsel %vm2341, %v2313, 0
        %v2349 = vsel %vm2341, %v2314, 0
        %v2352 = vsel %vm2341, %v2315, 0
        %v2355 = vsel %vm2341, %v2316, 0
        %v2358 = vsel %vm2341, %v2317, 0
        %v2361 = vsel %vm2341, %v2318, 0
        %v2364 = vsel %vm2341, %v2319, 0
        %v2367 = vsel %vm1008, %v2337, 0
        %2369 = vmatprep.subr.bf16.mxu0 0
        %2370 = vmatpush1.bf16.msra.mxu0 0
        %2371 = vmatprep.subr.bf16.mxu0 0
        %2372 = vmatpush1.bf16.msra.mxu0 0
        %2373 = vmatprep.subr.bf16.mxu0 0
        %2374 = vmatpush1.bf16.msra.mxu0 0
        %2375 = vmatprep.subr.bf16.mxu0 0
        %2376 = vmatpush1.bf16.msra.mxu0 0
        %2377 = vmatprep.subr.bf16.mxu0 0
        %2378 = vmatpush1.bf16.msra.mxu0 %v2367
        %2379 = vmatprep.subr.bf16.mxu0 0
        %2380 = vmatpush1.bf16.msra.mxu0 %v2336
        %2381 = vmatprep.subr.bf16.mxu0 0
        %2382 = vmatpush1.bf16.msra.mxu0 %v2335
        %2383 = vmatprep.subr.bf16.mxu0 0
        %2384 = vmatpush1.bf16.msra.mxu0 %v2334
        %2385 = vmatprep.subr.bf16.mxu0 0
        %2386 = vmatpush2.bf16.msra.mxu0 0
        %2387 = vmatprep.subr.bf16.mxu0 0
        %2388 = vmatpush2.bf16.msra.mxu0 0
        %2389 = vmatprep.subr.bf16.mxu0 0
        %2390 = vmatpush2.bf16.msra.mxu0 0
        %2391 = vmatprep.subr.bf16.mxu0 0
        %2392 = vmatpush2.bf16.msra.mxu0 0
        %2393 = vmatprep.subr.bf16.mxu0 0
        %2394 = vmatpush2.bf16.msra.mxu0 0
        %2395 = vmatprep.subr.bf16.mxu0 0
        %2396 = vmatpush2.bf16.msra.mxu0 0
        %2397 = vmatprep.subr.bf16.mxu0 0
        %2398 = vmatpush2.bf16.msra.mxu0 0
        %2399 = vmatprep.subr.bf16.mxu0 0
        %2400 = vmatpush2.bf16.msra.mxu0 0
        %2401 = vmatprep.mubr.bf16.mxu0 0
        %2402 = vmatmul.mubr.bf16.gmra.mxu0 %v2343
        %v2403 = vpop.f32.mrf.mxu0
        %v2404 = vadd.f32 %v2278, %v2403
        %v2405 = vpop.f32.mrf.mxu0
        %v2406 = vpop.f32.mrf.mxu0
        %v2407 = vadd.f32 %v2278, %v2406
        %v2408 = vpop.f32.mrf.mxu0
        %2409 = vmatprep.mubr.bf16.mxu0 0
        %2410 = vmatmul.mubr.bf16.gmra.mxu0 %v2346
        %v2411 = vpop.f32.mrf.mxu0
        %v2412 = vadd.f32 %v2278, %v2411
        %v2413 = vpop.f32.mrf.mxu0
        %v2414 = vpop.f32.mrf.mxu0
        %v2415 = vadd.f32 %v2278, %v2414
        %v2416 = vpop.f32.mrf.mxu0
        %2417 = vmatprep.mubr.bf16.mxu0 0
        %2418 = vmatmul.mubr.bf16.gmra.mxu0 %v2349
        %v2419 = vpop.f32.mrf.mxu0
        %v2420 = vadd.f32 %v2278, %v2419
        %v2421 = vpop.f32.mrf.mxu0
        %v2422 = vpop.f32.mrf.mxu0
        %v2423 = vadd.f32 %v2278, %v2422
        %v2424 = vpop.f32.mrf.mxu0
        %2425 = vmatprep.mubr.bf16.mxu0 0
        %2426 = vmatmul.mubr.bf16.gmra.mxu0 %v2352
        %v2427 = vpop.f32.mrf.mxu0
        %v2428 = vadd.f32 %v2278, %v2427
        %v2429 = vpop.f32.mrf.mxu0
        %v2430 = vpop.f32.mrf.mxu0
        %v2431 = vadd.f32 %v2278, %v2430
        %v2432 = vpop.f32.mrf.mxu0
        %2433 = vmatprep.mubr.bf16.mxu0 0
        %2434 = vmatmul.mubr.bf16.gmra.mxu0 %v2355
        %v2435 = vpop.f32.mrf.mxu0
        %v2436 = vadd.f32 %v2278, %v2435
        %v2437 = vpop.f32.mrf.mxu0
        %v2438 = vpop.f32.mrf.mxu0
        %v2439 = vadd.f32 %v2278, %v2438
        %v2440 = vpop.f32.mrf.mxu0
        %2441 = vmatprep.mubr.bf16.mxu0 0
        %2442 = vmatmul.mubr.bf16.gmra.mxu0 %v2358
        %v2443 = vpop.f32.mrf.mxu0
        %v2444 = vadd.f32 %v2278, %v2443
        %v2445 = vpop.f32.mrf.mxu0
        %v2446 = vpop.f32.mrf.mxu0
        %v2447 = vadd.f32 %v2278, %v2446
        %v2448 = vpop.f32.mrf.mxu0
        %2449 = vmatprep.mubr.bf16.mxu0 0
        %2450 = vmatmul.mubr.bf16.gmra.mxu0 %v2361
        %v2451 = vpop.f32.mrf.mxu0
        %v2452 = vadd.f32 %v2278, %v2451
        %v2453 = vpop.f32.mrf.mxu0
        %v2454 = vpop.f32.mrf.mxu0
        %v2455 = vadd.f32 %v2278, %v2454
        %v2456 = vpop.f32.mrf.mxu0
        %2457 = vmatprep.mubr.bf16.mxu0 0
        %2458 = vmatmul.mubr.bf16.gmra.mxu0 %v2364
        %v2459 = vpop.f32.mrf.mxu0
        %v2460 = vadd.f32 %v2278, %v2459
        %v2461 = vpop.f32.mrf.mxu0
        %v2462 = vpop.f32.mrf.mxu0
        %v2463 = vadd.f32 %v2278, %v2462
        %v2464 = vpop.f32.mrf.mxu0
        %2465 = vdwg.mxu0
        %v2466 = vmax.f32 %v2404, 0.0
        %v2467 = vmax.f32 %v2407, 0.0
        %v2468 = vmax.f32 %v2412, 0.0
        %v2469 = vmax.f32 %v2415, 0.0
        %v2470 = vmax.f32 %v2420, 0.0
        %v2471 = vmax.f32 %v2423, 0.0
        %v2472 = vmax.f32 %v2428, 0.0
        %v2473 = vmax.f32 %v2431, 0.0
        %v2474 = vmax.f32 %v2436, 0.0
        %v2475 = vmax.f32 %v2439, 0.0
        %v2476 = vmax.f32 %v2444, 0.0
        %v2477 = vmax.f32 %v2447, 0.0
        %v2478 = vmax.f32 %v2452, 0.0
        %v2479 = vmax.f32 %v2455, 0.0
        %v2480 = vmax.f32 %v2460, 0.0
        %v2481 = vmax.f32 %v2463, 0.0
        %2498 = vrot.lane.b32.xlu0 %v2466, 8
        %v2499 = vpop.permute.xlu0 %2498
        %2500 = vrot.lane.b32.xlu0 %v2467, 8
        %v2501 = vpop.permute.xlu0 %2500
        %2502 = vrot.lane.b32.xlu0 %v2468, 8
        %v2503 = vpop.permute.xlu0 %2502
        %2504 = vrot.lane.b32.xlu0 %v2469, 8
        %v2505 = vpop.permute.xlu0 %2504
        %2506 = vrot.lane.b32.xlu0 %v2470, 8
        %v2507 = vpop.permute.xlu0 %2506
        %2508 = vrot.lane.b32.xlu0 %v2471, 8
        %v2509 = vpop.permute.xlu0 %2508
        %2510 = vrot.lane.b32.xlu0 %v2472, 8
        %v2511 = vpop.permute.xlu0 %2510
        %2512 = vrot.lane.b32.xlu0 %v2473, 8
        %v2513 = vpop.permute.xlu0 %2512
        %2514 = vrot.lane.b32.xlu0 %v2474, 8
        %v2515 = vpop.permute.xlu0 %2514
        %2516 = vrot.lane.b32.xlu0 %v2475, 8
        %v2517 = vpop.permute.xlu0 %2516
        %2518 = vrot.lane.b32.xlu0 %v2476, 8
        %v2519 = vpop.permute.xlu0 %2518
        %2520 = vrot.lane.b32.xlu0 %v2477, 8
        %v2521 = vpop.permute.xlu0 %2520
        %2522 = vrot.lane.b32.xlu0 %v2478, 8
        %v2523 = vpop.permute.xlu0 %2522
        %2524 = vrot.lane.b32.xlu0 %v2479, 8
        %v2525 = vpop.permute.xlu0 %2524
        %2526 = vrot.lane.b32.xlu0 %v2480, 8
        %v2527 = vpop.permute.xlu0 %2526
        %2528 = vrot.lane.b32.xlu0 %v2481, 8
        %v2529 = vpop.permute.xlu0 %2528
        %vm2546 = vcmask 64512
        %v2547 = vsel %vm2546, %v1109, %v2499
        %v2548 = vsel %vm2546, %v1110, %v2501
        %v2549 = vsel %vm2546, %v1111, %v2503
        %v2550 = vsel %vm2546, %v1112, %v2505
        %v2551 = vsel %vm2546, %v1113, %v2507
        %v2552 = vsel %vm2546, %v1114, %v2509
        %v2553 = vsel %vm2546, %v1115, %v2511
        %v2554 = vsel %vm2546, %v1116, %v2513
        %v2555 = vsel %vm2546, %v1117, %v2515
        %v2556 = vsel %vm2546, %v1118, %v2517
        %v2557 = vsel %vm2546, %v1119, %v2519
        %v2558 = vsel %vm2546, %v1120, %v2521
        %v2559 = vsel %vm2546, %v1121, %v2523
        %v2560 = vsel %vm2546, %v1122, %v2525
        %v2561 = vsel %vm2546, %v1123, %v2527
        %v2562 = vsel %vm2546, %v1124, %v2529
        %v2563 = vpack.c.bf16 %v2548, %v2547
        %v2564 = vpack.c.bf16 %v2550, %v2549
        %v2565 = vpack.c.bf16 %v2552, %v2551
        %v2566 = vpack.c.bf16 %v2554, %v2553
        %v2567 = vpack.c.bf16 %v2556, %v2555
        %v2568 = vpack.c.bf16 %v2558, %v2557
        %v2569 = vpack.c.bf16 %v2560, %v2559
        %v2570 = vpack.c.bf16 %v2562, %v2561
        %v2579 = vunpack.c.l.b16 %v2563
        %v2580 = vunpack.c.h.b16 %v2563
        %v2581 = vunpack.c.l.b16 %v2564
        %v2582 = vunpack.c.h.b16 %v2564
        %v2583 = vunpack.c.l.b16 %v2565
        %v2584 = vunpack.c.h.b16 %v2565
        %v2585 = vunpack.c.l.b16 %v2566
        %v2586 = vunpack.c.h.b16 %v2566
        %v2587 = vunpack.c.l.b16 %v2567
        %v2588 = vunpack.c.h.b16 %v2567
        %v2589 = vunpack.c.l.b16 %v2568
        %v2590 = vunpack.c.h.b16 %v2568
        %v2591 = vunpack.c.l.b16 %v2569
        %v2592 = vunpack.c.h.b16 %v2569
        %v2593 = vunpack.c.l.b16 %v2570
        %v2594 = vunpack.c.h.b16 %v2570
        %v2595 = vpack.c.b16 %v2579, %v2579
        %v2596 = vpack.c.b16 %v2580, %v2580
        %v2597 = vpack.c.b16 %v2581, %v2581
        %v2598 = vpack.c.b16 %v2582, %v2582
        %v2599 = vpack.c.b16 %v2583, %v2583
        %v2600 = vpack.c.b16 %v2584, %v2584
        %v2601 = vpack.c.b16 %v2585, %v2585
        %v2602 = vpack.c.b16 %v2586, %v2586
        %v2603 = vpack.c.b16 %v2587, %v2587
        %v2604 = vpack.c.b16 %v2588, %v2588
        %v2605 = vpack.c.b16 %v2589, %v2589
        %v2606 = vpack.c.b16 %v2590, %v2590
        %v2607 = vpack.c.b16 %v2591, %v2591
        %v2608 = vpack.c.b16 %v2592, %v2592
        %v2609 = vpack.c.b16 %v2593, %v2593
        %v2610 = vpack.c.b16 %v2594, %v2594
        %vm2627 = vcmask 125952
        %2628 = vst.msk [vmem:[%s442] sm:$0xf] %vm2627, %v2595
        %2629 = vst.msk [vmem:[%s442 + $0x4] sm:$0xf] %vm2627, %v2596
        %2630 = vst.msk [vmem:[%s442 + $0x8] sm:$0xf] %vm2627, %v2597
        %2631 = vst.msk [vmem:[%s442 + $0xc] sm:$0xf] %vm2627, %v2598
        %2632 = vst.msk [vmem:[%s442 + $0x10] sm:$0xf] %vm2627, %v2599
        %2633 = vst.msk [vmem:[%s442 + $0x14] sm:$0xf] %vm2627, %v2600
        %2634 = vst.msk [vmem:[%s442 + $0x18] sm:$0xf] %vm2627, %v2601
        %2635 = vst.msk [vmem:[%s442 + $0x1c] sm:$0xf] %vm2627, %v2602
        %2636 = vst.msk [vmem:[%s442 + $0x20] sm:$0xf] %vm2627, %v2603
        %2637 = vst.msk [vmem:[%s442 + $0x24] sm:$0xf] %vm2627, %v2604
        %2638 = vst.msk [vmem:[%s442 + $0x28] sm:$0xf] %vm2627, %v2605
        %2639 = vst.msk [vmem:[%s442 + $0x2c] sm:$0xf] %vm2627, %v2606
        %2640 = vst.msk [vmem:[%s442 + $0x30] sm:$0xf] %vm2627, %v2607
        %2641 = vst.msk [vmem:[%s442 + $0x34] sm:$0xf] %vm2627, %v2608
        %2642 = vst.msk [vmem:[%s442 + $0x38] sm:$0xf] %vm2627, %v2609
        %2643 = vst.msk [vmem:[%s442 + $0x3c] sm:$0xf] %vm2627, %v2610
        %s2644 = sand.u32 %s271, 1
        %s2645 = scalar_lea.sflag [#allocation4], %s2644
        %s2646 = sand.u32 %s271, 1
        %s2647 = smul.addr %s2646, 64
        %s2648 = scalar_lea.vmem [#allocation3], %s2647
        // Predicated region
        $region57: #{tpu_custom_call.1} parent=55 // pred_check
          %p2649 = pneg %p281
        $region58: #{tpu_custom_call.1} parent=55 // pred_check_branch
          %2651 = sbr.rel (%p2649) target = $region60
        $region59: #{tpu_custom_call.1} parent=55 // pred_region
          %s2652 = smul.u32 8, %s28
          %s2654 = ssub.s32 1024, 1024
          %2655 = vsyncadd %s2645, %s2654
          %s2656 = smul.addr %s2652, 2
          %s2657 = smul.addr %s27, 32
          %s2658 = sadd.s32 %s2656, %s2657
          %s2659 = smul.addr %s2658, 64
          %s2660 = scalar_lea.hbm %s9, %s2659
          %s2661 = sshll.u32 %s2648, 4
          %s2662 = int_to_ptr.vmem [resolvable:$true] %s2661
          %2667 = dma.vmem_to_hbm [thread:$0]  %s2662, 1024, %s2660, %s2645, 64, 64, 4
        $region60: #{tpu_custom_call.1} parent=55 // pred_fallthru
          _
      $region56: #{tpu_custom_call.1} parent=5 // pred_fallthru
        _
      %p2668 = scmp.le.s32.totalorder 2, %s18
      // Predicated region
      $region61: #{tpu_custom_call.1} parent=5 // pred_check
        %p2669 = pneg %p2668
      $region62: #{tpu_custom_call.1} parent=5 // pred_check_branch
        %2671 = sbr.rel (%p2669) target = $region64
      $region63: #{tpu_custom_call.1} parent=5 // pred_region
        %s2672 = ssub.s32 %s18, 2
        // Predicated region
        $region65: #{tpu_custom_call.1} parent=63 // pred_check
          %p2673 = pneg %p287
        $region66: #{tpu_custom_call.1} parent=63 // pred_check_branch
          %2675 = sbr.rel (%p2673) target = $region68
        $region67: #{tpu_custom_call.1} parent=63 // pred_region
          %s2676 = sand.u32 %s272, 1
          %s2677 = scalar_lea.sflag [#allocation4], %s2676
          %s2678 = sand.u32 %s272, 1
          %s2679 = smul.addr %s2678, 64
          %s2680 = scalar_lea.vmem [#allocation3], %s2679
          %2681 = dma.done %s2677, 1024
        $region68: #{tpu_custom_call.1} parent=63 // pred_fallthru
          _
      $region64: #{tpu_custom_call.1} parent=5 // pred_fallthru
        _
    $region6: #{tpu_custom_call.1} parent=1 // loop_footer
      %s22 = sadd.s32 1, %s18
    $region7: #{tpu_custom_call.1} parent=1 // loop_footer_branch
      %17 = sbr.rel target = $region3
    $region8: #{tpu_custom_call.1} parent=1 // loop_exit
      _
    %2682 = vsyncpa [#allocation4], 1
    %s2683 = scalar_lea.sflag [#allocation4], 1
    %2684 = vsyncpa %s2683, 1

</llo_original>
